<compile_context>
chip_gen: v5e
topology: v5e:2x2
jax: 0.10.0
libtpu: 0.0.40
codegen_flags: <defaults>
</compile_context>

<pallas_src>
import jax
import jax.numpy as jnp
from jax.experimental import pallas as pl
from jax.experimental.pallas import tpu as pltpu

TB_MAX = 512  # max batch tile: multiple of 128 (v5e MXU M) and 256 (v6e/v7x)


def _round_up(n, m):
    return ((n + m - 1) // m) * m


def _tile_config(batch):
    """Adaptive batch tile.

    Big tiles (up to TB_MAX) to amortize per-grid-step overhead and hit the
    HBM roofline, but: (a) tiny batches get a tiny tile (no padding waste),
    and (b) medium batches are split into exactly 2 tiles so the two v7x
    TensorCores both get work.  Tiles are always sublane (8) aligned.
    """
    b_al = _round_up(batch, 8)
    if b_al >= 2 * TB_MAX:
        tb = TB_MAX
    elif b_al >= 16:
        tb = _round_up((b_al + 1) // 2, 8)   # exactly 2 grid steps
    else:
        tb = b_al                            # single small tile
    return tb, _round_up(b_al, tb)


def simplenet_kernel(x_ref, w1_ref, b1_ref, w2_ref, b2_ref, w3_ref, b3_ref,
                     o_ref):
    # x arrives in native f32; cast to bf16 in-register (no extra HBM pass).
    x = x_ref[...].astype(jnp.bfloat16)

    # fc1 + relu : (TB,2048)bf16 @ (2048,256)bf16 -> (TB,256) f32
    h1 = jnp.dot(x, w1_ref[...], preferred_element_type=jnp.float32)
    h1 = jnp.maximum(h1 + b1_ref[...], 0.0)

    # fc2 + relu : bf16 operands, f32 accumulate (cols 64..127 are zero pad)
    h2 = jnp.dot(h1.astype(jnp.bfloat16), w2_ref[...],
                 preferred_element_type=jnp.float32)
    h2 = jnp.maximum(h2 + b2_ref[...], 0.0)

    # fc3 : bf16 operands, f32 accumulate (only cols 0..1 are real)
    logits = jnp.dot(h2.astype(jnp.bfloat16), w3_ref[...],
                     preferred_element_type=jnp.float32)
    logits = logits + b3_ref[...]

    # softmax over the 2 real classes; padded lanes -> -inf -> exp() == 0.
    # Kept 128-lane wide on purpose: lane-dense stores beat masked vst.msk.
    lane = jax.lax.broadcasted_iota(jnp.int32, logits.shape, dimension=1)
    logits = jnp.where(lane < 2, logits, -jnp.inf)
    m = jnp.max(logits, axis=-1, keepdims=True)
    e = jnp.exp(logits - m)
    denom = jnp.sum(e, axis=-1, keepdims=True)
    # approx reciprocal runs on the EUP (free slot); row sums are ~1 +- 1e-3.
    o_ref[...] = (e * pl.reciprocal(denom, approx=True)).astype(o_ref.dtype)


def prepare_params(params):
    """One-time parameter preparation (hoisted out of the forward path).

    bf16 casts for all matmul weights; fc2/fc3 lane-padded to 128 wide so all
    intermediates and the output tile stay lane-dense.  Zero padding keeps the
    math exact.  Biases stay f32 (added after the f32-accumulated dots).
    """
    w1, b1, w2, b2, w3, b3 = params
    w1b = w1.astype(jnp.bfloat16)                                  # (2048,256)
    b1p = b1.reshape(1, 256).astype(jnp.float32)
    w2p = jnp.zeros((256, 128), jnp.bfloat16).at[:, :64].set(
        w2.astype(jnp.bfloat16))
    b2p = jnp.zeros((1, 128), jnp.float32).at[:, :64].set(b2.reshape(1, 64))
    w3p = jnp.zeros((128, 128), jnp.bfloat16).at[:64, :2].set(
        w3.astype(jnp.bfloat16))
    b3p = jnp.zeros((1, 128), jnp.float32).at[:, :2].set(b3.reshape(1, 2))
    return (w1b, b1p, w2p, b2p, w3p, b3p)


@jax.jit
def simplenet_forward(x, prepared_params):
    """x: any shape whose total size is B*2048; returns (B, 2) softmax probs."""
    x2d = x.reshape(-1, 2048)
    batch = x2d.shape[0]
    tb, b_pad = _tile_config(batch)
    if b_pad != batch:
        # Tail-only zero pad in the native dtype (skipped when not needed).
        x2d = jnp.pad(x2d, ((0, b_pad - batch), (0, 0)))

    w1b, b1p, w2p, b2p, w3p, b3p = prepared_params
    const = lambda shape: pl.BlockSpec(shape, lambda i: (0,) * len(shape))

    out = pl.pallas_call(
        simplenet_kernel,
        out_shape=jax.ShapeDtypeStruct((b_pad, 128), jnp.bfloat16),
        grid=(b_pad // tb,),
        in_specs=[
            pl.BlockSpec((tb, 2048), lambda i: (i, 0)),   # x: batch-tiled
            const((2048, 256)), const((1, 256)),          # fc1 (VMEM resident)
            const((256, 128)),  const((1, 128)),          # fc2 (resident, padded)
            const((128, 128)),  const((1, 128)),          # fc3 (resident, padded)
        ],
        out_specs=pl.BlockSpec((tb, 128), lambda i: (i, 0)),
        compiler_params=pltpu.CompilerParams(
            dimension_semantics=("parallel",),
            vmem_limit_bytes=32 << 20,  # footprint ~12 MiB at tb=512
        ),
    )(x2d, w1b, b1p, w2p, b2p, w3p, b3p)

    # Slice off padded rows/lanes; upcast the tiny (B,2) result to f32.
    return out[:batch, :2].astype(jnp.float32)


def init_params(key):
    """Deterministic init mimicking nn.Linear's uniform(-1/sqrt(fan_in), ...)."""
    dims = [(2048, 256), (256, 64), (64, 2)]
    params = []
    for fan_in, fan_out in dims:
        kw, kb, key = jax.random.split(key, 3)
        bound = 1.0 / jnp.sqrt(float(fan_in))
        # stored as (in, out) so the kernel computes x @ W
        w = jax.random.uniform(kw, (fan_in, fan_out), jnp.float32, -bound, bound)
        b = jax.random.uniform(kb, (1, fan_out), jnp.float32, -bound, bound)
        params.extend([w, b])
    return tuple(params)


if __name__ == "__main__":
    key = jax.random.PRNGKey(0)
    kx, kp = jax.random.split(key)

    # batch=8; NCHW-like input (8, 2, 32, 32) = 2048 feats/row, flattened
    # inside the wrapper exactly like x.view(-1, 2048).
    x = jax.random.normal(kx, (8, 2, 32, 32), jnp.float32)
    params = init_params(kp)
    prepared = prepare_params(params)   # one-time weight prep (hoisted)

    out = simplenet_forward(x, prepared)
    out = jax.block_until_ready(out)

    # sanity check against a pure-JAX f32 reference (bf16 matmuls + bf16
    # output + approx reciprocal => loose-ish tolerances)
    x2d = x.reshape(-1, 2048)
    w1, b1, w2, b2, w3, b3 = params
    h1 = jnp.maximum(x2d @ w1 + b1, 0.0)
    h2 = jnp.maximum(h1 @ w2 + b2, 0.0)
    ref = jax.nn.softmax(h2 @ w3 + b3, axis=1)

    assert out.shape == (8, 2)
    assert jnp.allclose(out, ref, atol=2e-2, rtol=2e-2)
    assert jnp.allclose(jnp.sum(out, axis=1), 1.0, atol=1e-2)

    print("KERNEL_OK")
</pallas_src>

<mosaic_0001>
module attributes {stable_mosaic.version = 11 : i64} {
  func.func @simplenet_kernel(%arg0: i32, %arg1: memref<8x2048xf32, #tpu.memory_space<vmem>>, %arg2: memref<2048x256xbf16, #tpu.memory_space<vmem>>, %arg3: memref<1x256xf32, #tpu.memory_space<vmem>>, %arg4: memref<256x128xbf16, #tpu.memory_space<vmem>>, %arg5: memref<1x128xf32, #tpu.memory_space<vmem>>, %arg6: memref<128x128xbf16, #tpu.memory_space<vmem>>, %arg7: memref<1x128xf32, #tpu.memory_space<vmem>>, %arg8: memref<8x128xbf16, #tpu.memory_space<vmem>>) attributes {dimension_semantics = [#tpu.dimension_semantics<parallel>], iteration_bounds = array<i64: 1>, scalar_prefetch = 0 : i64, scratch_operands = 0 : i64, tpu.core_type = #tpu.core_type<tc>, window_params = [{transform_indices = @transform_0, window_bounds = array<i64: 8, 2048>}, {pipeline_mode = #tpu.pipeline_mode<synchronous>, transform_indices = @transform_1, window_bounds = array<i64: 2048, 256>}, {pipeline_mode = #tpu.pipeline_mode<synchronous>, transform_indices = @transform_2, window_bounds = array<i64: 1, 256>}, {pipeline_mode = #tpu.pipeline_mode<synchronous>, transform_indices = @transform_3, window_bounds = array<i64: 256, 128>}, {pipeline_mode = #tpu.pipeline_mode<synchronous>, transform_indices = @transform_4, window_bounds = array<i64: 1, 128>}, {pipeline_mode = #tpu.pipeline_mode<synchronous>, transform_indices = @transform_5, window_bounds = array<i64: 128, 128>}, {pipeline_mode = #tpu.pipeline_mode<synchronous>, transform_indices = @transform_6, window_bounds = array<i64: 1, 128>}, {transform_indices = @transform_7, window_bounds = array<i64: 8, 128>}]} {
    %c0 = arith.constant 0 : index
    %c0_0 = arith.constant 0 : index
    %0 = vector.load %arg1[%c0, %c0_0] : memref<8x2048xf32, #tpu.memory_space<vmem>>, vector<8x2048xf32>
    %1 = arith.truncf %0 : vector<8x2048xf32> to vector<8x2048xbf16>
    %c0_1 = arith.constant 0 : index
    %c0_2 = arith.constant 0 : index
    %2 = vector.load %arg2[%c0_1, %c0_2] : memref<2048x256xbf16, #tpu.memory_space<vmem>>, vector<2048x256xbf16>
    %cst = arith.constant dense<0.000000e+00> : vector<8x256xf32>
    %3 = tpu.matmul %1, %2, %cst {dimension_numbers = #tpu.dot_dimension_numbers<[1], [0], [0], [1], [0, 0, 1, 1], [], []>} : vector<8x2048xbf16>, vector<2048x256xbf16>, vector<8x256xf32> -> vector<8x256xf32>
    %c0_3 = arith.constant 0 : index
    %c0_4 = arith.constant 0 : index
    %4 = vector.load %arg3[%c0_3, %c0_4] : memref<1x256xf32, #tpu.memory_space<vmem>>, vector<1x256xf32>
    %5 = vector.broadcast %4 : vector<1x256xf32> to vector<8x256xf32>
    %6 = arith.addf %3, %5 : vector<8x256xf32>
    %cst_5 = arith.constant 0.000000e+00 : f32
    %7 = vector.broadcast %cst_5 : f32 to vector<8x256xf32>
    %8 = arith.maximumf %6, %7 : vector<8x256xf32>
    %9 = arith.truncf %8 : vector<8x256xf32> to vector<8x256xbf16>
    %c0_6 = arith.constant 0 : index
    %c0_7 = arith.constant 0 : index
    %10 = vector.load %arg4[%c0_6, %c0_7] : memref<256x128xbf16, #tpu.memory_space<vmem>>, vector<256x128xbf16>
    %cst_8 = arith.constant dense<0.000000e+00> : vector<8x128xf32>
    %11 = tpu.matmul %9, %10, %cst_8 {dimension_numbers = #tpu.dot_dimension_numbers<[1], [0], [0], [1], [0, 0, 1, 1], [], []>} : vector<8x256xbf16>, vector<256x128xbf16>, vector<8x128xf32> -> vector<8x128xf32>
    %c0_9 = arith.constant 0 : index
    %c0_10 = arith.constant 0 : index
    %12 = vector.load %arg5[%c0_9, %c0_10] : memref<1x128xf32, #tpu.memory_space<vmem>>, vector<1x128xf32>
    %13 = vector.broadcast %12 : vector<1x128xf32> to vector<8x128xf32>
    %14 = arith.addf %11, %13 : vector<8x128xf32>
    %cst_11 = arith.constant 0.000000e+00 : f32
    %15 = vector.broadcast %cst_11 : f32 to vector<8x128xf32>
    %16 = arith.maximumf %14, %15 : vector<8x128xf32>
    %17 = arith.truncf %16 : vector<8x128xf32> to vector<8x128xbf16>
    %c0_12 = arith.constant 0 : index
    %c0_13 = arith.constant 0 : index
    %18 = vector.load %arg6[%c0_12, %c0_13] : memref<128x128xbf16, #tpu.memory_space<vmem>>, vector<128x128xbf16>
    %cst_14 = arith.constant dense<0.000000e+00> : vector<8x128xf32>
    %19 = tpu.matmul %17, %18, %cst_14 {dimension_numbers = #tpu.dot_dimension_numbers<[1], [0], [0], [1], [0, 0, 1, 1], [], []>} : vector<8x128xbf16>, vector<128x128xbf16>, vector<8x128xf32> -> vector<8x128xf32>
    %c0_15 = arith.constant 0 : index
    %c0_16 = arith.constant 0 : index
    %20 = vector.load %arg7[%c0_15, %c0_16] : memref<1x128xf32, #tpu.memory_space<vmem>>, vector<1x128xf32>
    %21 = vector.broadcast %20 : vector<1x128xf32> to vector<8x128xf32>
    %22 = arith.addf %19, %21 : vector<8x128xf32>
    %23 = tpu.iota {dimensions = array<i32: 1>} : vector<8x128xi32>
    %c2_i32 = arith.constant 2 : i32
    %24 = vector.broadcast %c2_i32 : i32 to vector<8x128xi32>
    %25 = arith.cmpi slt, %23, %24 : vector<8x128xi32>
    %cst_17 = arith.constant 0xFF800000 : f32
    %26 = vector.broadcast %cst_17 : f32 to vector<8x128xf32>
    %27 = arith.select %25, %22, %26 : vector<8x128xi1>, vector<8x128xf32>
    %cst_18 = arith.constant dense<0xFF800000> : vector<8xf32>
    %28 = vector.multi_reduction <maximumf>, %27, %cst_18 [1] : vector<8x128xf32> to vector<8xf32>
    %29 = vector.shape_cast %28 : vector<8xf32> to vector<8x1xf32>
    %30 = vector.broadcast %29 : vector<8x1xf32> to vector<8x128xf32>
    %31 = arith.subf %27, %30 : vector<8x128xf32>
    %32 = math.exp %31 : vector<8x128xf32>
    %cst_19 = arith.constant dense<0.000000e+00> : vector<8xf32>
    %33 = vector.multi_reduction <add>, %32, %cst_19 [1] : vector<8x128xf32> to vector<8xf32>
    %34 = vector.shape_cast %33 : vector<8xf32> to vector<8x1xf32>
    %35 = tpu.reciprocal %34 {approx = true} : vector<8x1xf32> -> vector<8x1xf32>
    %36 = vector.broadcast %35 : vector<8x1xf32> to vector<8x128xf32>
    %37 = arith.mulf %32, %36 : vector<8x128xf32>
    %38 = arith.truncf %37 : vector<8x128xf32> to vector<8x128xbf16>
    %c0_20 = arith.constant 0 : index
    %c0_21 = arith.constant 0 : index
    %39 = vector.load %arg8[%c0_20, %c0_21] : memref<8x128xbf16, #tpu.memory_space<vmem>>, vector<8x128xbf16>
    tpu.vector_store %arg8[%c0_20, %c0_21], %38 {strides = array<i32>} : memref<8x128xbf16, #tpu.memory_space<vmem>>, vector<8x128xbf16>,
    return
  }
  func.func @transform_0(%arg0: i32) -> (i32, i32) {
    %c0_i32 = arith.constant 0 : i32
    %c0_i32_0 = arith.constant 0 : i32
    return %arg0, %c0_i32 : i32, i32
  }
  func.func @transform_1(%arg0: i32) -> (i32, i32) {
    %c0_i32 = arith.constant 0 : i32
    %c0_i32_0 = arith.constant 0 : i32
    %c0_i32_1 = arith.constant 0 : i32
    return %c0_i32, %c0_i32_0 : i32, i32
  }
  func.func @transform_2(%arg0: i32) -> (i32, i32) {
    %c0_i32 = arith.constant 0 : i32
    %c0_i32_0 = arith.constant 0 : i32
    %c0_i32_1 = arith.constant 0 : i32
    return %c0_i32, %c0_i32_0 : i32, i32
  }
  func.func @transform_3(%arg0: i32) -> (i32, i32) {
    %c0_i32 = arith.constant 0 : i32
    %c0_i32_0 = arith.constant 0 : i32
    %c0_i32_1 = arith.constant 0 : i32
    return %c0_i32, %c0_i32_0 : i32, i32
  }
  func.func @transform_4(%arg0: i32) -> (i32, i32) {
    %c0_i32 = arith.constant 0 : i32
    %c0_i32_0 = arith.constant 0 : i32
    %c0_i32_1 = arith.constant 0 : i32
    return %c0_i32, %c0_i32_0 : i32, i32
  }
  func.func @transform_5(%arg0: i32) -> (i32, i32) {
    %c0_i32 = arith.constant 0 : i32
    %c0_i32_0 = arith.constant 0 : i32
    %c0_i32_1 = arith.constant 0 : i32
    return %c0_i32, %c0_i32_0 : i32, i32
  }
  func.func @transform_6(%arg0: i32) -> (i32, i32) {
    %c0_i32 = arith.constant 0 : i32
    %c0_i32_0 = arith.constant 0 : i32
    %c0_i32_1 = arith.constant 0 : i32
    return %c0_i32, %c0_i32_0 : i32, i32
  }
  func.func @transform_7(%arg0: i32) -> (i32, i32) {
    %c0_i32 = arith.constant 0 : i32
    %c0_i32_0 = arith.constant 0 : i32
    return %arg0, %c0_i32 : i32, i32
  }
}

</mosaic_0001>

<llo_original>
// kernel: simplenet_forward.1
$region0: #{simplenet_forward.1}
  #allocation0 [shape = 'u32[]', space=smem, size = 0x4, offset = 0x4, fixed_abs, tag = 'smem constant byte address 0x4 - core index']
  #allocation1 [shape = 'u32[72,128]{1,0:T(1,128)}', space=vmem, size = 0x9000, scoped, tag = 'internal scratch']
  %s0 = inlined_call_operand.vmem [shape: f32[8,2048], index: 0, kind: input, shape index: {}]
  %s1 = inlined_call_operand.hbm [shape: bf16[2048,256], index: 1, kind: input, shape index: {}]
  %s2 = inlined_call_operand.vmem [shape: f32[1,256], index: 2, kind: input, shape index: {}]
  %s3 = inlined_call_operand.vmem [shape: bf16[256,128], index: 3, kind: input, shape index: {}]
  %s4 = inlined_call_operand.vmem [shape: f32[1,128], index: 4, kind: input, shape index: {}]
  %s5 = inlined_call_operand.vmem [shape: bf16[128,128], index: 5, kind: input, shape index: {}]
  %s6 = inlined_call_operand.vmem [shape: f32[1,128], index: 6, kind: input, shape index: {}]
  %s7 = inlined_call_operand.vmem [shape: bf16[8,128], index: 7, kind: output, shape index: {}]
  %s8 = sld [smem:[#allocation0]]
  $region42: #{simplenet_forward.1} parent=0
    _
  %s10 = ssub.s32 1, %s8
  %s11 = scalar_select 0, %s10, %s8
  $region1: #{simplenet_forward.1} parent=0
    #allocation2 [shape = 'u8[1048576]{0}', space=vmem, size = 0x100000, scoped, tag = 'input window, operand 1, single buffered']
    #allocation3 [shape = 's32[1]{0}', space=sflag, size = 0x4, scoped, tag = 'scoped memory for simplenet_forward.1']
    %12 = vsyncpa [#allocation3], 0
    // Predicated region
    $region2: #{simplenet_forward.1} parent=1 // pred_check
      _
    $region3: #{simplenet_forward.1} parent=1 // pred_check_branch
      %14 = sbr.rel (0) target = $region5
    $region4: #{simplenet_forward.1} parent=1 // pred_region
      _
    $region5: #{simplenet_forward.1} parent=1 // pred_fallthru
      _
    // Predicated region
    $region6: #{simplenet_forward.1} parent=1 // pred_check
      _
    $region7: #{simplenet_forward.1} parent=1 // pred_check_branch
      %16 = sbr.rel (0) target = $region9
    $region8: #{simplenet_forward.1} parent=1 // pred_region
      %18 = vsyncadd [#allocation3], 0
      %s19 = sshll.u32 %s1, 4
      %s20 = int_to_ptr.hbm [resolvable:$true] %s19
      %s21 = sshll.u32 [#allocation2], 4
      %s22 = int_to_ptr.vmem [resolvable:$true] %s21
      %27 = dma.hbm_to_vmem [thread:$0]  %s20, 32768, %s22, [#allocation3], 128, 128, 8
    $region9: #{simplenet_forward.1} parent=1 // pred_fallthru
      _
    // Predicated region
    $region10: #{simplenet_forward.1} parent=1 // pred_check
      _
    $region11: #{simplenet_forward.1} parent=1 // pred_check_branch
      %29 = sbr.rel (0) target = $region13
    $region12: #{simplenet_forward.1} parent=1 // pred_region
      _
    $region13: #{simplenet_forward.1} parent=1 // pred_fallthru
      _
    // Predicated region
    $region14: #{simplenet_forward.1} parent=1 // pred_check
      _
    $region15: #{simplenet_forward.1} parent=1 // pred_check_branch
      %31 = sbr.rel (0) target = $region17
    $region16: #{simplenet_forward.1} parent=1 // pred_region
      _
    $region17: #{simplenet_forward.1} parent=1 // pred_fallthru
      _
    // Predicated region
    $region18: #{simplenet_forward.1} parent=1 // pred_check
      _
    $region19: #{simplenet_forward.1} parent=1 // pred_check_branch
      %33 = sbr.rel (0) target = $region21
    $region20: #{simplenet_forward.1} parent=1 // pred_region
      _
    $region21: #{simplenet_forward.1} parent=1 // pred_fallthru
      _
    // Predicated region
    $region22: #{simplenet_forward.1} parent=1 // pred_check
      _
    $region23: #{simplenet_forward.1} parent=1 // pred_check_branch
      %35 = sbr.rel (0) target = $region25
    $region24: #{simplenet_forward.1} parent=1 // pred_region
      _
    $region25: #{simplenet_forward.1} parent=1 // pred_fallthru
      _
    // Predicated region
    $region26: #{simplenet_forward.1} parent=1 // pred_check
      _
    $region27: #{simplenet_forward.1} parent=1 // pred_check_branch
      %37 = sbr.rel (0) target = $region29
    $region28: #{simplenet_forward.1} parent=1 // pred_region
      _
    $region29: #{simplenet_forward.1} parent=1 // pred_fallthru
      _
    // Predicated region
    $region30: #{simplenet_forward.1} parent=1 // pred_check
      _
    $region31: #{simplenet_forward.1} parent=1 // pred_check_branch
      %39 = sbr.rel (0) target = $region33
    $region32: #{simplenet_forward.1} parent=1 // pred_region
      %41 = dma.done [#allocation3], 32768
    $region33: #{simplenet_forward.1} parent=1 // pred_fallthru
      _
    %v42 = vld [vmem:[%s0] sm:$0xff]
    %v43 = vld [vmem:[%s0 + $0x8] sm:$0xff]
    %v44 = vld [vmem:[%s0 + $0x10] sm:$0xff]
    %v45 = vld [vmem:[%s0 + $0x18] sm:$0xff]
    %v46 = vld [vmem:[%s0 + $0x20] sm:$0xff]
    %v47 = vld [vmem:[%s0 + $0x28] sm:$0xff]
    %v48 = vld [vmem:[%s0 + $0x30] sm:$0xff]
    %v49 = vld [vmem:[%s0 + $0x38] sm:$0xff]
    %v50 = vld [vmem:[%s0 + $0x40] sm:$0xff]
    %v51 = vld [vmem:[%s0 + $0x48] sm:$0xff]
    %v52 = vld [vmem:[%s0 + $0x50] sm:$0xff]
    %v53 = vld [vmem:[%s0 + $0x58] sm:$0xff]
    %v54 = vld [vmem:[%s0 + $0x60] sm:$0xff]
    %v55 = vld [vmem:[%s0 + $0x68] sm:$0xff]
    %v56 = vld [vmem:[%s0 + $0x70] sm:$0xff]
    %v57 = vld [vmem:[%s0 + $0x78] sm:$0xff]
    %v58 = vpack.c.bf16 %v42, %v42
    %v59 = vpack.c.bf16 %v43, %v43
    %v60 = vpack.c.bf16 %v44, %v44
    %v61 = vpack.c.bf16 %v45, %v45
    %v62 = vpack.c.bf16 %v46, %v46
    %v63 = vpack.c.bf16 %v47, %v47
    %v64 = vpack.c.bf16 %v48, %v48
    %v65 = vpack.c.bf16 %v49, %v49
    %v66 = vpack.c.bf16 %v50, %v50
    %v67 = vpack.c.bf16 %v51, %v51
    %v68 = vpack.c.bf16 %v52, %v52
    %v69 = vpack.c.bf16 %v53, %v53
    %v70 = vpack.c.bf16 %v54, %v54
    %v71 = vpack.c.bf16 %v55, %v55
    %v72 = vpack.c.bf16 %v56, %v56
    %v73 = vpack.c.bf16 %v57, %v57
    %v74 = vld [vmem:[#allocation2] sm:$0xff]
    %v75 = vld [vmem:[#allocation2 + $0x8] sm:$0xff]
    %v76 = vld [vmem:[#allocation2 + $0x10] sm:$0xff]
    %v77 = vld [vmem:[#allocation2 + $0x18] sm:$0xff]
    %v78 = vld [vmem:[#allocation2 + $0x20] sm:$0xff]
    %v79 = vld [vmem:[#allocation2 + $0x28] sm:$0xff]
    %v80 = vld [vmem:[#allocation2 + $0x30] sm:$0xff]
    %v81 = vld [vmem:[#allocation2 + $0x38] sm:$0xff]
    %v82 = vld [vmem:[#allocation2 + $0x40] sm:$0xff]
    %v83 = vld [vmem:[#allocation2 + $0x48] sm:$0xff]
    %v84 = vld [vmem:[#allocation2 + $0x50] sm:$0xff]
    %v85 = vld [vmem:[#allocation2 + $0x58] sm:$0xff]
    %v86 = vld [vmem:[#allocation2 + $0x60] sm:$0xff]
    %v87 = vld [vmem:[#allocation2 + $0x68] sm:$0xff]
    %v88 = vld [vmem:[#allocation2 + $0x70] sm:$0xff]
    %v89 = vld [vmem:[#allocation2 + $0x78] sm:$0xff]
    %v90 = vld [vmem:[#allocation2 + $0x80] sm:$0xff]
    %v91 = vld [vmem:[#allocation2 + $0x88] sm:$0xff]
    %v92 = vld [vmem:[#allocation2 + $0x90] sm:$0xff]
    %v93 = vld [vmem:[#allocation2 + $0x98] sm:$0xff]
    %v94 = vld [vmem:[#allocation2 + $0xa0] sm:$0xff]
    %v95 = vld [vmem:[#allocation2 + $0xa8] sm:$0xff]
    %v96 = vld [vmem:[#allocation2 + $0xb0] sm:$0xff]
    %v97 = vld [vmem:[#allocation2 + $0xb8] sm:$0xff]
    %v98 = vld [vmem:[#allocation2 + $0xc0] sm:$0xff]
    %v99 = vld [vmem:[#allocation2 + $0xc8] sm:$0xff]
    %v100 = vld [vmem:[#allocation2 + $0xd0] sm:$0xff]
    %v101 = vld [vmem:[#allocation2 + $0xd8] sm:$0xff]
    %v102 = vld [vmem:[#allocation2 + $0xe0] sm:$0xff]
    %v103 = vld [vmem:[#allocation2 + $0xe8] sm:$0xff]
    %v104 = vld [vmem:[#allocation2 + $0xf0] sm:$0xff]
    %v105 = vld [vmem:[#allocation2 + $0xf8] sm:$0xff]
    %v106 = vld [vmem:[#allocation2 + $0x100] sm:$0xff]
    %v107 = vld [vmem:[#allocation2 + $0x108] sm:$0xff]
    %v108 = vld [vmem:[#allocation2 + $0x110] sm:$0xff]
    %v109 = vld [vmem:[#allocation2 + $0x118] sm:$0xff]
    %v110 = vld [vmem:[#allocation2 + $0x120] sm:$0xff]
    %v111 = vld [vmem:[#allocation2 + $0x128] sm:$0xff]
    %v112 = vld [vmem:[#allocation2 + $0x130] sm:$0xff]
    %v113 = vld [vmem:[#allocation2 + $0x138] sm:$0xff]
    %v114 = vld [vmem:[#allocation2 + $0x140] sm:$0xff]
    %v115 = vld [vmem:[#allocation2 + $0x148] sm:$0xff]
    %v116 = vld [vmem:[#allocation2 + $0x150] sm:$0xff]
    %v117 = vld [vmem:[#allocation2 + $0x158] sm:$0xff]
    %v118 = vld [vmem:[#allocation2 + $0x160] sm:$0xff]
    %v119 = vld [vmem:[#allocation2 + $0x168] sm:$0xff]
    %v120 = vld [vmem:[#allocation2 + $0x170] sm:$0xff]
    %v121 = vld [vmem:[#allocation2 + $0x178] sm:$0xff]
    %v122 = vld [vmem:[#allocation2 + $0x180] sm:$0xff]
    %v123 = vld [vmem:[#allocation2 + $0x188] sm:$0xff]
    %v124 = vld [vmem:[#allocation2 + $0x190] sm:$0xff]
    %v125 = vld [vmem:[#allocation2 + $0x198] sm:$0xff]
    %v126 = vld [vmem:[#allocation2 + $0x1a0] sm:$0xff]
    %v127 = vld [vmem:[#allocation2 + $0x1a8] sm:$0xff]
    %v128 = vld [vmem:[#allocation2 + $0x1b0] sm:$0xff]
    %v129 = vld [vmem:[#allocation2 + $0x1b8] sm:$0xff]
    %v130 = vld [vmem:[#allocation2 + $0x1c0] sm:$0xff]
    %v131 = vld [vmem:[#allocation2 + $0x1c8] sm:$0xff]
    %v132 = vld [vmem:[#allocation2 + $0x1d0] sm:$0xff]
    %v133 = vld [vmem:[#allocation2 + $0x1d8] sm:$0xff]
    %v134 = vld [vmem:[#allocation2 + $0x1e0] sm:$0xff]
    %v135 = vld [vmem:[#allocation2 + $0x1e8] sm:$0xff]
    %v136 = vld [vmem:[#allocation2 + $0x1f0] sm:$0xff]
    %v137 = vld [vmem:[#allocation2 + $0x1f8] sm:$0xff]
    %v138 = vld [vmem:[#allocation2 + $0x200] sm:$0xff]
    %v139 = vld [vmem:[#allocation2 + $0x208] sm:$0xff]
    %v140 = vld [vmem:[#allocation2 + $0x210] sm:$0xff]
    %v141 = vld [vmem:[#allocation2 + $0x218] sm:$0xff]
    %v142 = vld [vmem:[#allocation2 + $0x220] sm:$0xff]
    %v143 = vld [vmem:[#allocation2 + $0x228] sm:$0xff]
    %v144 = vld [vmem:[#allocation2 + $0x230] sm:$0xff]
    %v145 = vld [vmem:[#allocation2 + $0x238] sm:$0xff]
    %v146 = vld [vmem:[#allocation2 + $0x240] sm:$0xff]
    %v147 = vld [vmem:[#allocation2 + $0x248] sm:$0xff]
    %v148 = vld [vmem:[#allocation2 + $0x250] sm:$0xff]
    %v149 = vld [vmem:[#allocation2 + $0x258] sm:$0xff]
    %v150 = vld [vmem:[#allocation2 + $0x260] sm:$0xff]
    %v151 = vld [vmem:[#allocation2 + $0x268] sm:$0xff]
    %v152 = vld [vmem:[#allocation2 + $0x270] sm:$0xff]
    %v153 = vld [vmem:[#allocation2 + $0x278] sm:$0xff]
    %v154 = vld [vmem:[#allocation2 + $0x280] sm:$0xff]
    %v155 = vld [vmem:[#allocation2 + $0x288] sm:$0xff]
    %v156 = vld [vmem:[#allocation2 + $0x290] sm:$0xff]
    %v157 = vld [vmem:[#allocation2 + $0x298] sm:$0xff]
    %v158 = vld [vmem:[#allocation2 + $0x2a0] sm:$0xff]
    %v159 = vld [vmem:[#allocation2 + $0x2a8] sm:$0xff]
    %v160 = vld [vmem:[#allocation2 + $0x2b0] sm:$0xff]
    %v161 = vld [vmem:[#allocation2 + $0x2b8] sm:$0xff]
    %v162 = vld [vmem:[#allocation2 + $0x2c0] sm:$0xff]
    %v163 = vld [vmem:[#allocation2 + $0x2c8] sm:$0xff]
    %v164 = vld [vmem:[#allocation2 + $0x2d0] sm:$0xff]
    %v165 = vld [vmem:[#allocation2 + $0x2d8] sm:$0xff]
    %v166 = vld [vmem:[#allocation2 + $0x2e0] sm:$0xff]
    %v167 = vld [vmem:[#allocation2 + $0x2e8] sm:$0xff]
    %v168 = vld [vmem:[#allocation2 + $0x2f0] sm:$0xff]
    %v169 = vld [vmem:[#allocation2 + $0x2f8] sm:$0xff]
    %v170 = vld [vmem:[#allocation2 + $0x300] sm:$0xff]
    %v171 = vld [vmem:[#allocation2 + $0x308] sm:$0xff]
    %v172 = vld [vmem:[#allocation2 + $0x310] sm:$0xff]
    %v173 = vld [vmem:[#allocation2 + $0x318] sm:$0xff]
    %v174 = vld [vmem:[#allocation2 + $0x320] sm:$0xff]
    %v175 = vld [vmem:[#allocation2 + $0x328] sm:$0xff]
    %v176 = vld [vmem:[#allocation2 + $0x330] sm:$0xff]
    %v177 = vld [vmem:[#allocation2 + $0x338] sm:$0xff]
    %v178 = vld [vmem:[#allocation2 + $0x340] sm:$0xff]
    %v179 = vld [vmem:[#allocation2 + $0x348] sm:$0xff]
    %v180 = vld [vmem:[#allocation2 + $0x350] sm:$0xff]
    %v181 = vld [vmem:[#allocation2 + $0x358] sm:$0xff]
    %v182 = vld [vmem:[#allocation2 + $0x360] sm:$0xff]
    %v183 = vld [vmem:[#allocation2 + $0x368] sm:$0xff]
    %v184 = vld [vmem:[#allocation2 + $0x370] sm:$0xff]
    %v185 = vld [vmem:[#allocation2 + $0x378] sm:$0xff]
    %v186 = vld [vmem:[#allocation2 + $0x380] sm:$0xff]
    %v187 = vld [vmem:[#allocation2 + $0x388] sm:$0xff]
    %v188 = vld [vmem:[#allocation2 + $0x390] sm:$0xff]
    %v189 = vld [vmem:[#allocation2 + $0x398] sm:$0xff]
    %v190 = vld [vmem:[#allocation2 + $0x3a0] sm:$0xff]
    %v191 = vld [vmem:[#allocation2 + $0x3a8] sm:$0xff]
    %v192 = vld [vmem:[#allocation2 + $0x3b0] sm:$0xff]
    %v193 = vld [vmem:[#allocation2 + $0x3b8] sm:$0xff]
    %v194 = vld [vmem:[#allocation2 + $0x3c0] sm:$0xff]
    %v195 = vld [vmem:[#allocation2 + $0x3c8] sm:$0xff]
    %v196 = vld [vmem:[#allocation2 + $0x3d0] sm:$0xff]
    %v197 = vld [vmem:[#allocation2 + $0x3d8] sm:$0xff]
    %v198 = vld [vmem:[#allocation2 + $0x3e0] sm:$0xff]
    %v199 = vld [vmem:[#allocation2 + $0x3e8] sm:$0xff]
    %v200 = vld [vmem:[#allocation2 + $0x3f0] sm:$0xff]
    %v201 = vld [vmem:[#allocation2 + $0x3f8] sm:$0xff]
    %v202 = vld [vmem:[#allocation2 + $0x400] sm:$0xff]
    %v203 = vld [vmem:[#allocation2 + $0x408] sm:$0xff]
    %v204 = vld [vmem:[#allocation2 + $0x410] sm:$0xff]
    %v205 = vld [vmem:[#allocation2 + $0x418] sm:$0xff]
    %v206 = vld [vmem:[#allocation2 + $0x420] sm:$0xff]
    %v207 = vld [vmem:[#allocation2 + $0x428] sm:$0xff]
    %v208 = vld [vmem:[#allocation2 + $0x430] sm:$0xff]
    %v209 = vld [vmem:[#allocation2 + $0x438] sm:$0xff]
    %v210 = vld [vmem:[#allocation2 + $0x440] sm:$0xff]
    %v211 = vld [vmem:[#allocation2 + $0x448] sm:$0xff]
    %v212 = vld [vmem:[#allocation2 + $0x450] sm:$0xff]
    %v213 = vld [vmem:[#allocation2 + $0x458] sm:$0xff]
    %v214 = vld [vmem:[#allocation2 + $0x460] sm:$0xff]
    %v215 = vld [vmem:[#allocation2 + $0x468] sm:$0xff]
    %v216 = vld [vmem:[#allocation2 + $0x470] sm:$0xff]
    %v217 = vld [vmem:[#allocation2 + $0x478] sm:$0xff]
    %v218 = vld [vmem:[#allocation2 + $0x480] sm:$0xff]
    %v219 = vld [vmem:[#allocation2 + $0x488] sm:$0xff]
    %v220 = vld [vmem:[#allocation2 + $0x490] sm:$0xff]
    %v221 = vld [vmem:[#allocation2 + $0x498] sm:$0xff]
    %v222 = vld [vmem:[#allocation2 + $0x4a0] sm:$0xff]
    %v223 = vld [vmem:[#allocation2 + $0x4a8] sm:$0xff]
    %v224 = vld [vmem:[#allocation2 + $0x4b0] sm:$0xff]
    %v225 = vld [vmem:[#allocation2 + $0x4b8] sm:$0xff]
    %v226 = vld [vmem:[#allocation2 + $0x4c0] sm:$0xff]
    %v227 = vld [vmem:[#allocation2 + $0x4c8] sm:$0xff]
    %v228 = vld [vmem:[#allocation2 + $0x4d0] sm:$0xff]
    %v229 = vld [vmem:[#allocation2 + $0x4d8] sm:$0xff]
    %v230 = vld [vmem:[#allocation2 + $0x4e0] sm:$0xff]
    %v231 = vld [vmem:[#allocation2 + $0x4e8] sm:$0xff]
    %v232 = vld [vmem:[#allocation2 + $0x4f0] sm:$0xff]
    %v233 = vld [vmem:[#allocation2 + $0x4f8] sm:$0xff]
    %v234 = vld [vmem:[#allocation2 + $0x500] sm:$0xff]
    %v235 = vld [vmem:[#allocation2 + $0x508] sm:$0xff]
    %v236 = vld [vmem:[#allocation2 + $0x510] sm:$0xff]
    %v237 = vld [vmem:[#allocation2 + $0x518] sm:$0xff]
    %v238 = vld [vmem:[#allocation2 + $0x520] sm:$0xff]
    %v239 = vld [vmem:[#allocation2 + $0x528] sm:$0xff]
    %v240 = vld [vmem:[#allocation2 + $0x530] sm:$0xff]
    %v241 = vld [vmem:[#allocation2 + $0x538] sm:$0xff]
    %v242 = vld [vmem:[#allocation2 + $0x540] sm:$0xff]
    %v243 = vld [vmem:[#allocation2 + $0x548] sm:$0xff]
    %v244 = vld [vmem:[#allocation2 + $0x550] sm:$0xff]
    %v245 = vld [vmem:[#allocation2 + $0x558] sm:$0xff]
    %v246 = vld [vmem:[#allocation2 + $0x560] sm:$0xff]
    %v247 = vld [vmem:[#allocation2 + $0x568] sm:$0xff]
    %v248 = vld [vmem:[#allocation2 + $0x570] sm:$0xff]
    %v249 = vld [vmem:[#allocation2 + $0x578] sm:$0xff]
    %v250 = vld [vmem:[#allocation2 + $0x580] sm:$0xff]
    %v251 = vld [vmem:[#allocation2 + $0x588] sm:$0xff]
    %v252 = vld [vmem:[#allocation2 + $0x590] sm:$0xff]
    %v253 = vld [vmem:[#allocation2 + $0x598] sm:$0xff]
    %v254 = vld [vmem:[#allocation2 + $0x5a0] sm:$0xff]
    %v255 = vld [vmem:[#allocation2 + $0x5a8] sm:$0xff]
    %v256 = vld [vmem:[#allocation2 + $0x5b0] sm:$0xff]
    %v257 = vld [vmem:[#allocation2 + $0x5b8] sm:$0xff]
    %v258 = vld [vmem:[#allocation2 + $0x5c0] sm:$0xff]
    %v259 = vld [vmem:[#allocation2 + $0x5c8] sm:$0xff]
    %v260 = vld [vmem:[#allocation2 + $0x5d0] sm:$0xff]
    %v261 = vld [vmem:[#allocation2 + $0x5d8] sm:$0xff]
    %v262 = vld [vmem:[#allocation2 + $0x5e0] sm:$0xff]
    %v263 = vld [vmem:[#allocation2 + $0x5e8] sm:$0xff]
    %v264 = vld [vmem:[#allocation2 + $0x5f0] sm:$0xff]
    %v265 = vld [vmem:[#allocation2 + $0x5f8] sm:$0xff]
    %v266 = vld [vmem:[#allocation2 + $0x600] sm:$0xff]
    %v267 = vld [vmem:[#allocation2 + $0x608] sm:$0xff]
    %v268 = vld [vmem:[#allocation2 + $0x610] sm:$0xff]
    %v269 = vld [vmem:[#allocation2 + $0x618] sm:$0xff]
    %v270 = vld [vmem:[#allocation2 + $0x620] sm:$0xff]
    %v271 = vld [vmem:[#allocation2 + $0x628] sm:$0xff]
    %v272 = vld [vmem:[#allocation2 + $0x630] sm:$0xff]
    %v273 = vld [vmem:[#allocation2 + $0x638] sm:$0xff]
    %v274 = vld [vmem:[#allocation2 + $0x640] sm:$0xff]
    %v275 = vld [vmem:[#allocation2 + $0x648] sm:$0xff]
    %v276 = vld [vmem:[#allocation2 + $0x650] sm:$0xff]
    %v277 = vld [vmem:[#allocation2 + $0x658] sm:$0xff]
    %v278 = vld [vmem:[#allocation2 + $0x660] sm:$0xff]
    %v279 = vld [vmem:[#allocation2 + $0x668] sm:$0xff]
    %v280 = vld [vmem:[#allocation2 + $0x670] sm:$0xff]
    %v281 = vld [vmem:[#allocation2 + $0x678] sm:$0xff]
    %v282 = vld [vmem:[#allocation2 + $0x680] sm:$0xff]
    %v283 = vld [vmem:[#allocation2 + $0x688] sm:$0xff]
    %v284 = vld [vmem:[#allocation2 + $0x690] sm:$0xff]
    %v285 = vld [vmem:[#allocation2 + $0x698] sm:$0xff]
    %v286 = vld [vmem:[#allocation2 + $0x6a0] sm:$0xff]
    %v287 = vld [vmem:[#allocation2 + $0x6a8] sm:$0xff]
    %v288 = vld [vmem:[#allocation2 + $0x6b0] sm:$0xff]
    %v289 = vld [vmem:[#allocation2 + $0x6b8] sm:$0xff]
    %v290 = vld [vmem:[#allocation2 + $0x6c0] sm:$0xff]
    %v291 = vld [vmem:[#allocation2 + $0x6c8] sm:$0xff]
    %v292 = vld [vmem:[#allocation2 + $0x6d0] sm:$0xff]
    %v293 = vld [vmem:[#allocation2 + $0x6d8] sm:$0xff]
    %v294 = vld [vmem:[#allocation2 + $0x6e0] sm:$0xff]
    %v295 = vld [vmem:[#allocation2 + $0x6e8] sm:$0xff]
    %v296 = vld [vmem:[#allocation2 + $0x6f0] sm:$0xff]
    %v297 = vld [vmem:[#allocation2 + $0x6f8] sm:$0xff]
    %v298 = vld [vmem:[#allocation2 + $0x700] sm:$0xff]
    %v299 = vld [vmem:[#allocation2 + $0x708] sm:$0xff]
    %v300 = vld [vmem:[#allocation2 + $0x710] sm:$0xff]
    %v301 = vld [vmem:[#allocation2 + $0x718] sm:$0xff]
    %v302 = vld [vmem:[#allocation2 + $0x720] sm:$0xff]
    %v303 = vld [vmem:[#allocation2 + $0x728] sm:$0xff]
    %v304 = vld [vmem:[#allocation2 + $0x730] sm:$0xff]
    %v305 = vld [vmem:[#allocation2 + $0x738] sm:$0xff]
    %v306 = vld [vmem:[#allocation2 + $0x740] sm:$0xff]
    %v307 = vld [vmem:[#allocation2 + $0x748] sm:$0xff]
    %v308 = vld [vmem:[#allocation2 + $0x750] sm:$0xff]
    %v309 = vld [vmem:[#allocation2 + $0x758] sm:$0xff]
    %v310 = vld [vmem:[#allocation2 + $0x760] sm:$0xff]
    %v311 = vld [vmem:[#allocation2 + $0x768] sm:$0xff]
    %v312 = vld [vmem:[#allocation2 + $0x770] sm:$0xff]
    %v313 = vld [vmem:[#allocation2 + $0x778] sm:$0xff]
    %v314 = vld [vmem:[#allocation2 + $0x780] sm:$0xff]
    %v315 = vld [vmem:[#allocation2 + $0x788] sm:$0xff]
    %v316 = vld [vmem:[#allocation2 + $0x790] sm:$0xff]
    %v317 = vld [vmem:[#allocation2 + $0x798] sm:$0xff]
    %v318 = vld [vmem:[#allocation2 + $0x7a0] sm:$0xff]
    %v319 = vld [vmem:[#allocation2 + $0x7a8] sm:$0xff]
    %v320 = vld [vmem:[#allocation2 + $0x7b0] sm:$0xff]
    %v321 = vld [vmem:[#allocation2 + $0x7b8] sm:$0xff]
    %v322 = vld [vmem:[#allocation2 + $0x7c0] sm:$0xff]
    %v323 = vld [vmem:[#allocation2 + $0x7c8] sm:$0xff]
    %v324 = vld [vmem:[#allocation2 + $0x7d0] sm:$0xff]
    %v325 = vld [vmem:[#allocation2 + $0x7d8] sm:$0xff]
    %v326 = vld [vmem:[#allocation2 + $0x7e0] sm:$0xff]
    %v327 = vld [vmem:[#allocation2 + $0x7e8] sm:$0xff]
    %v328 = vld [vmem:[#allocation2 + $0x7f0] sm:$0xff]
    %v329 = vld [vmem:[#allocation2 + $0x7f8] sm:$0xff]
    %v330 = vld [vmem:[%s2] sm:$0x3]
    %v332 = vperm.slane %v330, 0
    %v333 = vperm.slane %v330, 1
    %v592 = vunpack.c.l.b16 %v74
    %v593 = vunpack.c.h.b16 %v74
    %v594 = vunpack.c.l.b16 %v75
    %v595 = vunpack.c.h.b16 %v75
    %v596 = vunpack.c.l.b16 %v76
    %v597 = vunpack.c.h.b16 %v76
    %v598 = vunpack.c.l.b16 %v77
    %v599 = vunpack.c.h.b16 %v77
    %v600 = vunpack.c.l.b16 %v78
    %v601 = vunpack.c.h.b16 %v78
    %v602 = vunpack.c.l.b16 %v79
    %v603 = vunpack.c.h.b16 %v79
    %v604 = vunpack.c.l.b16 %v80
    %v605 = vunpack.c.h.b16 %v80
    %v606 = vunpack.c.l.b16 %v81
    %v607 = vunpack.c.h.b16 %v81
    %v608 = vunpack.c.l.b16 %v82
    %v609 = vunpack.c.h.b16 %v82
    %v610 = vunpack.c.l.b16 %v83
    %v611 = vunpack.c.h.b16 %v83
    %v612 = vunpack.c.l.b16 %v84
    %v613 = vunpack.c.h.b16 %v84
    %v614 = vunpack.c.l.b16 %v85
    %v615 = vunpack.c.h.b16 %v85
    %v616 = vunpack.c.l.b16 %v86
    %v617 = vunpack.c.h.b16 %v86
    %v618 = vunpack.c.l.b16 %v87
    %v619 = vunpack.c.h.b16 %v87
    %v620 = vunpack.c.l.b16 %v88
    %v621 = vunpack.c.h.b16 %v88
    %v622 = vunpack.c.l.b16 %v89
    %v623 = vunpack.c.h.b16 %v89
    %v624 = vunpack.c.l.b16 %v90
    %v625 = vunpack.c.h.b16 %v90
    %v626 = vunpack.c.l.b16 %v91
    %v627 = vunpack.c.h.b16 %v91
    %v628 = vunpack.c.l.b16 %v92
    %v629 = vunpack.c.h.b16 %v92
    %v630 = vunpack.c.l.b16 %v93
    %v631 = vunpack.c.h.b16 %v93
    %v632 = vunpack.c.l.b16 %v94
    %v633 = vunpack.c.h.b16 %v94
    %v634 = vunpack.c.l.b16 %v95
    %v635 = vunpack.c.h.b16 %v95
    %v636 = vunpack.c.l.b16 %v96
    %v637 = vunpack.c.h.b16 %v96
    %v638 = vunpack.c.l.b16 %v97
    %v639 = vunpack.c.h.b16 %v97
    %v640 = vunpack.c.l.b16 %v98
    %v641 = vunpack.c.h.b16 %v98
    %v642 = vunpack.c.l.b16 %v99
    %v643 = vunpack.c.h.b16 %v99
    %v644 = vunpack.c.l.b16 %v100
    %v645 = vunpack.c.h.b16 %v100
    %v646 = vunpack.c.l.b16 %v101
    %v647 = vunpack.c.h.b16 %v101
    %v648 = vunpack.c.l.b16 %v102
    %v649 = vunpack.c.h.b16 %v102
    %v650 = vunpack.c.l.b16 %v103
    %v651 = vunpack.c.h.b16 %v103
    %v652 = vunpack.c.l.b16 %v104
    %v653 = vunpack.c.h.b16 %v104
    %v654 = vunpack.c.l.b16 %v105
    %v655 = vunpack.c.h.b16 %v105
    %v656 = vunpack.c.l.b16 %v106
    %v657 = vunpack.c.h.b16 %v106
    %v658 = vunpack.c.l.b16 %v107
    %v659 = vunpack.c.h.b16 %v107
    %v660 = vunpack.c.l.b16 %v108
    %v661 = vunpack.c.h.b16 %v108
    %v662 = vunpack.c.l.b16 %v109
    %v663 = vunpack.c.h.b16 %v109
    %v664 = vunpack.c.l.b16 %v110
    %v665 = vunpack.c.h.b16 %v110
    %v666 = vunpack.c.l.b16 %v111
    %v667 = vunpack.c.h.b16 %v111
    %v668 = vunpack.c.l.b16 %v112
    %v669 = vunpack.c.h.b16 %v112
    %v670 = vunpack.c.l.b16 %v113
    %v671 = vunpack.c.h.b16 %v113
    %v672 = vunpack.c.l.b16 %v114
    %v673 = vunpack.c.h.b16 %v114
    %v674 = vunpack.c.l.b16 %v115
    %v675 = vunpack.c.h.b16 %v115
    %v676 = vunpack.c.l.b16 %v116
    %v677 = vunpack.c.h.b16 %v116
    %v678 = vunpack.c.l.b16 %v117
    %v679 = vunpack.c.h.b16 %v117
    %v680 = vunpack.c.l.b16 %v118
    %v681 = vunpack.c.h.b16 %v118
    %v682 = vunpack.c.l.b16 %v119
    %v683 = vunpack.c.h.b16 %v119
    %v684 = vunpack.c.l.b16 %v120
    %v685 = vunpack.c.h.b16 %v120
    %v686 = vunpack.c.l.b16 %v121
    %v687 = vunpack.c.h.b16 %v121
    %v688 = vunpack.c.l.b16 %v122
    %v689 = vunpack.c.h.b16 %v122
    %v690 = vunpack.c.l.b16 %v123
    %v691 = vunpack.c.h.b16 %v123
    %v692 = vunpack.c.l.b16 %v124
    %v693 = vunpack.c.h.b16 %v124
    %v694 = vunpack.c.l.b16 %v125
    %v695 = vunpack.c.h.b16 %v125
    %v696 = vunpack.c.l.b16 %v126
    %v697 = vunpack.c.h.b16 %v126
    %v698 = vunpack.c.l.b16 %v127
    %v699 = vunpack.c.h.b16 %v127
    %v700 = vunpack.c.l.b16 %v128
    %v701 = vunpack.c.h.b16 %v128
    %v702 = vunpack.c.l.b16 %v129
    %v703 = vunpack.c.h.b16 %v129
    %v704 = vunpack.c.l.b16 %v130
    %v705 = vunpack.c.h.b16 %v130
    %v706 = vunpack.c.l.b16 %v131
    %v707 = vunpack.c.h.b16 %v131
    %v708 = vunpack.c.l.b16 %v132
    %v709 = vunpack.c.h.b16 %v132
    %v710 = vunpack.c.l.b16 %v133
    %v711 = vunpack.c.h.b16 %v133
    %v712 = vunpack.c.l.b16 %v134
    %v713 = vunpack.c.h.b16 %v134
    %v714 = vunpack.c.l.b16 %v135
    %v715 = vunpack.c.h.b16 %v135
    %v716 = vunpack.c.l.b16 %v136
    %v717 = vunpack.c.h.b16 %v136
    %v718 = vunpack.c.l.b16 %v137
    %v719 = vunpack.c.h.b16 %v137
    %v720 = vunpack.c.l.b16 %v138
    %v721 = vunpack.c.h.b16 %v138
    %v722 = vunpack.c.l.b16 %v139
    %v723 = vunpack.c.h.b16 %v139
    %v724 = vunpack.c.l.b16 %v140
    %v725 = vunpack.c.h.b16 %v140
    %v726 = vunpack.c.l.b16 %v141
    %v727 = vunpack.c.h.b16 %v141
    %v728 = vunpack.c.l.b16 %v142
    %v729 = vunpack.c.h.b16 %v142
    %v730 = vunpack.c.l.b16 %v143
    %v731 = vunpack.c.h.b16 %v143
    %v732 = vunpack.c.l.b16 %v144
    %v733 = vunpack.c.h.b16 %v144
    %v734 = vunpack.c.l.b16 %v145
    %v735 = vunpack.c.h.b16 %v145
    %v736 = vunpack.c.l.b16 %v146
    %v737 = vunpack.c.h.b16 %v146
    %v738 = vunpack.c.l.b16 %v147
    %v739 = vunpack.c.h.b16 %v147
    %v740 = vunpack.c.l.b16 %v148
    %v741 = vunpack.c.h.b16 %v148
    %v742 = vunpack.c.l.b16 %v149
    %v743 = vunpack.c.h.b16 %v149
    %v744 = vunpack.c.l.b16 %v150
    %v745 = vunpack.c.h.b16 %v150
    %v746 = vunpack.c.l.b16 %v151
    %v747 = vunpack.c.h.b16 %v151
    %v748 = vunpack.c.l.b16 %v152
    %v749 = vunpack.c.h.b16 %v152
    %v750 = vunpack.c.l.b16 %v153
    %v751 = vunpack.c.h.b16 %v153
    %v752 = vunpack.c.l.b16 %v154
    %v753 = vunpack.c.h.b16 %v154
    %v754 = vunpack.c.l.b16 %v155
    %v755 = vunpack.c.h.b16 %v155
    %v756 = vunpack.c.l.b16 %v156
    %v757 = vunpack.c.h.b16 %v156
    %v758 = vunpack.c.l.b16 %v157
    %v759 = vunpack.c.h.b16 %v157
    %v760 = vunpack.c.l.b16 %v158
    %v761 = vunpack.c.h.b16 %v158
    %v762 = vunpack.c.l.b16 %v159
    %v763 = vunpack.c.h.b16 %v159
    %v764 = vunpack.c.l.b16 %v160
    %v765 = vunpack.c.h.b16 %v160
    %v766 = vunpack.c.l.b16 %v161
    %v767 = vunpack.c.h.b16 %v161
    %v768 = vunpack.c.l.b16 %v162
    %v769 = vunpack.c.h.b16 %v162
    %v770 = vunpack.c.l.b16 %v163
    %v771 = vunpack.c.h.b16 %v163
    %v772 = vunpack.c.l.b16 %v164
    %v773 = vunpack.c.h.b16 %v164
    %v774 = vunpack.c.l.b16 %v165
    %v775 = vunpack.c.h.b16 %v165
    %v776 = vunpack.c.l.b16 %v166
    %v777 = vunpack.c.h.b16 %v166
    %v778 = vunpack.c.l.b16 %v167
    %v779 = vunpack.c.h.b16 %v167
    %v780 = vunpack.c.l.b16 %v168
    %v781 = vunpack.c.h.b16 %v168
    %v782 = vunpack.c.l.b16 %v169
    %v783 = vunpack.c.h.b16 %v169
    %v784 = vunpack.c.l.b16 %v170
    %v785 = vunpack.c.h.b16 %v170
    %v786 = vunpack.c.l.b16 %v171
    %v787 = vunpack.c.h.b16 %v171
    %v788 = vunpack.c.l.b16 %v172
    %v789 = vunpack.c.h.b16 %v172
    %v790 = vunpack.c.l.b16 %v173
    %v791 = vunpack.c.h.b16 %v173
    %v792 = vunpack.c.l.b16 %v174
    %v793 = vunpack.c.h.b16 %v174
    %v794 = vunpack.c.l.b16 %v175
    %v795 = vunpack.c.h.b16 %v175
    %v796 = vunpack.c.l.b16 %v176
    %v797 = vunpack.c.h.b16 %v176
    %v798 = vunpack.c.l.b16 %v177
    %v799 = vunpack.c.h.b16 %v177
    %v800 = vunpack.c.l.b16 %v178
    %v801 = vunpack.c.h.b16 %v178
    %v802 = vunpack.c.l.b16 %v179
    %v803 = vunpack.c.h.b16 %v179
    %v804 = vunpack.c.l.b16 %v180
    %v805 = vunpack.c.h.b16 %v180
    %v806 = vunpack.c.l.b16 %v181
    %v807 = vunpack.c.h.b16 %v181
    %v808 = vunpack.c.l.b16 %v182
    %v809 = vunpack.c.h.b16 %v182
    %v810 = vunpack.c.l.b16 %v183
    %v811 = vunpack.c.h.b16 %v183
    %v812 = vunpack.c.l.b16 %v184
    %v813 = vunpack.c.h.b16 %v184
    %v814 = vunpack.c.l.b16 %v185
    %v815 = vunpack.c.h.b16 %v185
    %v816 = vunpack.c.l.b16 %v186
    %v817 = vunpack.c.h.b16 %v186
    %v818 = vunpack.c.l.b16 %v187
    %v819 = vunpack.c.h.b16 %v187
    %v820 = vunpack.c.l.b16 %v188
    %v821 = vunpack.c.h.b16 %v188
    %v822 = vunpack.c.l.b16 %v189
    %v823 = vunpack.c.h.b16 %v189
    %v824 = vunpack.c.l.b16 %v190
    %v825 = vunpack.c.h.b16 %v190
    %v826 = vunpack.c.l.b16 %v191
    %v827 = vunpack.c.h.b16 %v191
    %v828 = vunpack.c.l.b16 %v192
    %v829 = vunpack.c.h.b16 %v192
    %v830 = vunpack.c.l.b16 %v193
    %v831 = vunpack.c.h.b16 %v193
    %v832 = vunpack.c.l.b16 %v194
    %v833 = vunpack.c.h.b16 %v194
    %v834 = vunpack.c.l.b16 %v195
    %v835 = vunpack.c.h.b16 %v195
    %v836 = vunpack.c.l.b16 %v196
    %v837 = vunpack.c.h.b16 %v196
    %v838 = vunpack.c.l.b16 %v197
    %v839 = vunpack.c.h.b16 %v197
    %v840 = vunpack.c.l.b16 %v198
    %v841 = vunpack.c.h.b16 %v198
    %v842 = vunpack.c.l.b16 %v199
    %v843 = vunpack.c.h.b16 %v199
    %v844 = vunpack.c.l.b16 %v200
    %v845 = vunpack.c.h.b16 %v200
    %v846 = vunpack.c.l.b16 %v201
    %v847 = vunpack.c.h.b16 %v201
    %v848 = vunpack.c.l.b16 %v202
    %v849 = vunpack.c.h.b16 %v202
    %v850 = vunpack.c.l.b16 %v203
    %v851 = vunpack.c.h.b16 %v203
    %v852 = vunpack.c.l.b16 %v204
    %v853 = vunpack.c.h.b16 %v204
    %v854 = vunpack.c.l.b16 %v205
    %v855 = vunpack.c.h.b16 %v205
    %v856 = vunpack.c.l.b16 %v206
    %v857 = vunpack.c.h.b16 %v206
    %v858 = vunpack.c.l.b16 %v207
    %v859 = vunpack.c.h.b16 %v207
    %v860 = vunpack.c.l.b16 %v208
    %v861 = vunpack.c.h.b16 %v208
    %v862 = vunpack.c.l.b16 %v209
    %v863 = vunpack.c.h.b16 %v209
    %v864 = vunpack.c.l.b16 %v210
    %v865 = vunpack.c.h.b16 %v210
    %v866 = vunpack.c.l.b16 %v211
    %v867 = vunpack.c.h.b16 %v211
    %v868 = vunpack.c.l.b16 %v212
    %v869 = vunpack.c.h.b16 %v212
    %v870 = vunpack.c.l.b16 %v213
    %v871 = vunpack.c.h.b16 %v213
    %v872 = vunpack.c.l.b16 %v214
    %v873 = vunpack.c.h.b16 %v214
    %v874 = vunpack.c.l.b16 %v215
    %v875 = vunpack.c.h.b16 %v215
    %v876 = vunpack.c.l.b16 %v216
    %v877 = vunpack.c.h.b16 %v216
    %v878 = vunpack.c.l.b16 %v217
    %v879 = vunpack.c.h.b16 %v217
    %v880 = vunpack.c.l.b16 %v218
    %v881 = vunpack.c.h.b16 %v218
    %v882 = vunpack.c.l.b16 %v219
    %v883 = vunpack.c.h.b16 %v219
    %v884 = vunpack.c.l.b16 %v220
    %v885 = vunpack.c.h.b16 %v220
    %v886 = vunpack.c.l.b16 %v221
    %v887 = vunpack.c.h.b16 %v221
    %v888 = vunpack.c.l.b16 %v222
    %v889 = vunpack.c.h.b16 %v222
    %v890 = vunpack.c.l.b16 %v223
    %v891 = vunpack.c.h.b16 %v223
    %v892 = vunpack.c.l.b16 %v224
    %v893 = vunpack.c.h.b16 %v224
    %v894 = vunpack.c.l.b16 %v225
    %v895 = vunpack.c.h.b16 %v225
    %v896 = vunpack.c.l.b16 %v226
    %v897 = vunpack.c.h.b16 %v226
    %v898 = vunpack.c.l.b16 %v227
    %v899 = vunpack.c.h.b16 %v227
    %v900 = vunpack.c.l.b16 %v228
    %v901 = vunpack.c.h.b16 %v228
    %v902 = vunpack.c.l.b16 %v229
    %v903 = vunpack.c.h.b16 %v229
    %v904 = vunpack.c.l.b16 %v230
    %v905 = vunpack.c.h.b16 %v230
    %v906 = vunpack.c.l.b16 %v231
    %v907 = vunpack.c.h.b16 %v231
    %v908 = vunpack.c.l.b16 %v232
    %v909 = vunpack.c.h.b16 %v232
    %v910 = vunpack.c.l.b16 %v233
    %v911 = vunpack.c.h.b16 %v233
    %v912 = vunpack.c.l.b16 %v234
    %v913 = vunpack.c.h.b16 %v234
    %v914 = vunpack.c.l.b16 %v235
    %v915 = vunpack.c.h.b16 %v235
    %v916 = vunpack.c.l.b16 %v236
    %v917 = vunpack.c.h.b16 %v236
    %v918 = vunpack.c.l.b16 %v237
    %v919 = vunpack.c.h.b16 %v237
    %v920 = vunpack.c.l.b16 %v238
    %v921 = vunpack.c.h.b16 %v238
    %v922 = vunpack.c.l.b16 %v239
    %v923 = vunpack.c.h.b16 %v239
    %v924 = vunpack.c.l.b16 %v240
    %v925 = vunpack.c.h.b16 %v240
    %v926 = vunpack.c.l.b16 %v241
    %v927 = vunpack.c.h.b16 %v241
    %v928 = vunpack.c.l.b16 %v242
    %v929 = vunpack.c.h.b16 %v242
    %v930 = vunpack.c.l.b16 %v243
    %v931 = vunpack.c.h.b16 %v243
    %v932 = vunpack.c.l.b16 %v244
    %v933 = vunpack.c.h.b16 %v244
    %v934 = vunpack.c.l.b16 %v245
    %v935 = vunpack.c.h.b16 %v245
    %v936 = vunpack.c.l.b16 %v246
    %v937 = vunpack.c.h.b16 %v246
    %v938 = vunpack.c.l.b16 %v247
    %v939 = vunpack.c.h.b16 %v247
    %v940 = vunpack.c.l.b16 %v248
    %v941 = vunpack.c.h.b16 %v248
    %v942 = vunpack.c.l.b16 %v249
    %v943 = vunpack.c.h.b16 %v249
    %v944 = vunpack.c.l.b16 %v250
    %v945 = vunpack.c.h.b16 %v250
    %v946 = vunpack.c.l.b16 %v251
    %v947 = vunpack.c.h.b16 %v251
    %v948 = vunpack.c.l.b16 %v252
    %v949 = vunpack.c.h.b16 %v252
    %v950 = vunpack.c.l.b16 %v253
    %v951 = vunpack.c.h.b16 %v253
    %v952 = vunpack.c.l.b16 %v254
    %v953 = vunpack.c.h.b16 %v254
    %v954 = vunpack.c.l.b16 %v255
    %v955 = vunpack.c.h.b16 %v255
    %v956 = vunpack.c.l.b16 %v256
    %v957 = vunpack.c.h.b16 %v256
    %v958 = vunpack.c.l.b16 %v257
    %v959 = vunpack.c.h.b16 %v257
    %v960 = vunpack.c.l.b16 %v258
    %v961 = vunpack.c.h.b16 %v258
    %v962 = vunpack.c.l.b16 %v259
    %v963 = vunpack.c.h.b16 %v259
    %v964 = vunpack.c.l.b16 %v260
    %v965 = vunpack.c.h.b16 %v260
    %v966 = vunpack.c.l.b16 %v261
    %v967 = vunpack.c.h.b16 %v261
    %v968 = vunpack.c.l.b16 %v262
    %v969 = vunpack.c.h.b16 %v262
    %v970 = vunpack.c.l.b16 %v263
    %v971 = vunpack.c.h.b16 %v263
    %v972 = vunpack.c.l.b16 %v264
    %v973 = vunpack.c.h.b16 %v264
    %v974 = vunpack.c.l.b16 %v265
    %v975 = vunpack.c.h.b16 %v265
    %v976 = vunpack.c.l.b16 %v266
    %v977 = vunpack.c.h.b16 %v266
    %v978 = vunpack.c.l.b16 %v267
    %v979 = vunpack.c.h.b16 %v267
    %v980 = vunpack.c.l.b16 %v268
    %v981 = vunpack.c.h.b16 %v268
    %v982 = vunpack.c.l.b16 %v269
    %v983 = vunpack.c.h.b16 %v269
    %v984 = vunpack.c.l.b16 %v270
    %v985 = vunpack.c.h.b16 %v270
    %v986 = vunpack.c.l.b16 %v271
    %v987 = vunpack.c.h.b16 %v271
    %v988 = vunpack.c.l.b16 %v272
    %v989 = vunpack.c.h.b16 %v272
    %v990 = vunpack.c.l.b16 %v273
    %v991 = vunpack.c.h.b16 %v273
    %v992 = vunpack.c.l.b16 %v274
    %v993 = vunpack.c.h.b16 %v274
    %v994 = vunpack.c.l.b16 %v275
    %v995 = vunpack.c.h.b16 %v275
    %v996 = vunpack.c.l.b16 %v276
    %v997 = vunpack.c.h.b16 %v276
    %v998 = vunpack.c.l.b16 %v277
    %v999 = vunpack.c.h.b16 %v277
    %v1000 = vunpack.c.l.b16 %v278
    %v1001 = vunpack.c.h.b16 %v278
    %v1002 = vunpack.c.l.b16 %v279
    %v1003 = vunpack.c.h.b16 %v279
    %v1004 = vunpack.c.l.b16 %v280
    %v1005 = vunpack.c.h.b16 %v280
    %v1006 = vunpack.c.l.b16 %v281
    %v1007 = vunpack.c.h.b16 %v281
    %v1008 = vunpack.c.l.b16 %v282
    %v1009 = vunpack.c.h.b16 %v282
    %v1010 = vunpack.c.l.b16 %v283
    %v1011 = vunpack.c.h.b16 %v283
    %v1012 = vunpack.c.l.b16 %v284
    %v1013 = vunpack.c.h.b16 %v284
    %v1014 = vunpack.c.l.b16 %v285
    %v1015 = vunpack.c.h.b16 %v285
    %v1016 = vunpack.c.l.b16 %v286
    %v1017 = vunpack.c.h.b16 %v286
    %v1018 = vunpack.c.l.b16 %v287
    %v1019 = vunpack.c.h.b16 %v287
    %v1020 = vunpack.c.l.b16 %v288
    %v1021 = vunpack.c.h.b16 %v288
    %v1022 = vunpack.c.l.b16 %v289
    %v1023 = vunpack.c.h.b16 %v289
    %v1024 = vunpack.c.l.b16 %v290
    %v1025 = vunpack.c.h.b16 %v290
    %v1026 = vunpack.c.l.b16 %v291
    %v1027 = vunpack.c.h.b16 %v291
    %v1028 = vunpack.c.l.b16 %v292
    %v1029 = vunpack.c.h.b16 %v292
    %v1030 = vunpack.c.l.b16 %v293
    %v1031 = vunpack.c.h.b16 %v293
    %v1032 = vunpack.c.l.b16 %v294
    %v1033 = vunpack.c.h.b16 %v294
    %v1034 = vunpack.c.l.b16 %v295
    %v1035 = vunpack.c.h.b16 %v295
    %v1036 = vunpack.c.l.b16 %v296
    %v1037 = vunpack.c.h.b16 %v296
    %v1038 = vunpack.c.l.b16 %v297
    %v1039 = vunpack.c.h.b16 %v297
    %v1040 = vunpack.c.l.b16 %v298
    %v1041 = vunpack.c.h.b16 %v298
    %v1042 = vunpack.c.l.b16 %v299
    %v1043 = vunpack.c.h.b16 %v299
    %v1044 = vunpack.c.l.b16 %v300
    %v1045 = vunpack.c.h.b16 %v300
    %v1046 = vunpack.c.l.b16 %v301
    %v1047 = vunpack.c.h.b16 %v301
    %v1048 = vunpack.c.l.b16 %v302
    %v1049 = vunpack.c.h.b16 %v302
    %v1050 = vunpack.c.l.b16 %v303
    %v1051 = vunpack.c.h.b16 %v303
    %v1052 = vunpack.c.l.b16 %v304
    %v1053 = vunpack.c.h.b16 %v304
    %v1054 = vunpack.c.l.b16 %v305
    %v1055 = vunpack.c.h.b16 %v305
    %v1056 = vunpack.c.l.b16 %v306
    %v1057 = vunpack.c.h.b16 %v306
    %v1058 = vunpack.c.l.b16 %v307
    %v1059 = vunpack.c.h.b16 %v307
    %v1060 = vunpack.c.l.b16 %v308
    %v1061 = vunpack.c.h.b16 %v308
    %v1062 = vunpack.c.l.b16 %v309
    %v1063 = vunpack.c.h.b16 %v309
    %v1064 = vunpack.c.l.b16 %v310
    %v1065 = vunpack.c.h.b16 %v310
    %v1066 = vunpack.c.l.b16 %v311
    %v1067 = vunpack.c.h.b16 %v311
    %v1068 = vunpack.c.l.b16 %v312
    %v1069 = vunpack.c.h.b16 %v312
    %v1070 = vunpack.c.l.b16 %v313
    %v1071 = vunpack.c.h.b16 %v313
    %v1072 = vunpack.c.l.b16 %v314
    %v1073 = vunpack.c.h.b16 %v314
    %v1074 = vunpack.c.l.b16 %v315
    %v1075 = vunpack.c.h.b16 %v315
    %v1076 = vunpack.c.l.b16 %v316
    %v1077 = vunpack.c.h.b16 %v316
    %v1078 = vunpack.c.l.b16 %v317
    %v1079 = vunpack.c.h.b16 %v317
    %v1080 = vunpack.c.l.b16 %v318
    %v1081 = vunpack.c.h.b16 %v318
    %v1082 = vunpack.c.l.b16 %v319
    %v1083 = vunpack.c.h.b16 %v319
    %v1084 = vunpack.c.l.b16 %v320
    %v1085 = vunpack.c.h.b16 %v320
    %v1086 = vunpack.c.l.b16 %v321
    %v1087 = vunpack.c.h.b16 %v321
    %v1088 = vunpack.c.l.b16 %v322
    %v1089 = vunpack.c.h.b16 %v322
    %v1090 = vunpack.c.l.b16 %v323
    %v1091 = vunpack.c.h.b16 %v323
    %v1092 = vunpack.c.l.b16 %v324
    %v1093 = vunpack.c.h.b16 %v324
    %v1094 = vunpack.c.l.b16 %v325
    %v1095 = vunpack.c.h.b16 %v325
    %v1096 = vunpack.c.l.b16 %v326
    %v1097 = vunpack.c.h.b16 %v326
    %v1098 = vunpack.c.l.b16 %v327
    %v1099 = vunpack.c.h.b16 %v327
    %v1100 = vunpack.c.l.b16 %v328
    %v1101 = vunpack.c.h.b16 %v328
    %v1102 = vunpack.c.l.b16 %v329
    %v1103 = vunpack.c.h.b16 %v329
    %v1104 = vpack.c.b16 %v594, %v592
    %v1105 = vpack.c.b16 %v595, %v593
    %v1106 = vpack.c.b16 %v598, %v596
    %v1107 = vpack.c.b16 %v599, %v597
    %v1108 = vpack.c.b16 %v602, %v600
    %v1109 = vpack.c.b16 %v603, %v601
    %v1110 = vpack.c.b16 %v606, %v604
    %v1111 = vpack.c.b16 %v607, %v605
    %v1112 = vpack.c.b16 %v610, %v608
    %v1113 = vpack.c.b16 %v611, %v609
    %v1114 = vpack.c.b16 %v614, %v612
    %v1115 = vpack.c.b16 %v615, %v613
    %v1116 = vpack.c.b16 %v618, %v616
    %v1117 = vpack.c.b16 %v619, %v617
    %v1118 = vpack.c.b16 %v622, %v620
    %v1119 = vpack.c.b16 %v623, %v621
    %v1120 = vpack.c.b16 %v626, %v624
    %v1121 = vpack.c.b16 %v627, %v625
    %v1122 = vpack.c.b16 %v630, %v628
    %v1123 = vpack.c.b16 %v631, %v629
    %v1124 = vpack.c.b16 %v634, %v632
    %v1125 = vpack.c.b16 %v635, %v633
    %v1126 = vpack.c.b16 %v638, %v636
    %v1127 = vpack.c.b16 %v639, %v637
    %v1128 = vpack.c.b16 %v642, %v640
    %v1129 = vpack.c.b16 %v643, %v641
    %v1130 = vpack.c.b16 %v646, %v644
    %v1131 = vpack.c.b16 %v647, %v645
    %v1132 = vpack.c.b16 %v650, %v648
    %v1133 = vpack.c.b16 %v651, %v649
    %v1134 = vpack.c.b16 %v654, %v652
    %v1135 = vpack.c.b16 %v655, %v653
    %v1136 = vpack.c.b16 %v658, %v656
    %v1137 = vpack.c.b16 %v659, %v657
    %v1138 = vpack.c.b16 %v662, %v660
    %v1139 = vpack.c.b16 %v663, %v661
    %v1140 = vpack.c.b16 %v666, %v664
    %v1141 = vpack.c.b16 %v667, %v665
    %v1142 = vpack.c.b16 %v670, %v668
    %v1143 = vpack.c.b16 %v671, %v669
    %v1144 = vpack.c.b16 %v674, %v672
    %v1145 = vpack.c.b16 %v675, %v673
    %v1146 = vpack.c.b16 %v678, %v676
    %v1147 = vpack.c.b16 %v679, %v677
    %v1148 = vpack.c.b16 %v682, %v680
    %v1149 = vpack.c.b16 %v683, %v681
    %v1150 = vpack.c.b16 %v686, %v684
    %v1151 = vpack.c.b16 %v687, %v685
    %v1152 = vpack.c.b16 %v690, %v688
    %v1153 = vpack.c.b16 %v691, %v689
    %v1154 = vpack.c.b16 %v694, %v692
    %v1155 = vpack.c.b16 %v695, %v693
    %v1156 = vpack.c.b16 %v698, %v696
    %v1157 = vpack.c.b16 %v699, %v697
    %v1158 = vpack.c.b16 %v702, %v700
    %v1159 = vpack.c.b16 %v703, %v701
    %v1160 = vpack.c.b16 %v706, %v704
    %v1161 = vpack.c.b16 %v707, %v705
    %v1162 = vpack.c.b16 %v710, %v708
    %v1163 = vpack.c.b16 %v711, %v709
    %v1164 = vpack.c.b16 %v714, %v712
    %v1165 = vpack.c.b16 %v715, %v713
    %v1166 = vpack.c.b16 %v718, %v716
    %v1167 = vpack.c.b16 %v719, %v717
    %v1168 = vpack.c.b16 %v722, %v720
    %v1169 = vpack.c.b16 %v723, %v721
    %v1170 = vpack.c.b16 %v726, %v724
    %v1171 = vpack.c.b16 %v727, %v725
    %v1172 = vpack.c.b16 %v730, %v728
    %v1173 = vpack.c.b16 %v731, %v729
    %v1174 = vpack.c.b16 %v734, %v732
    %v1175 = vpack.c.b16 %v735, %v733
    %v1176 = vpack.c.b16 %v738, %v736
    %v1177 = vpack.c.b16 %v739, %v737
    %v1178 = vpack.c.b16 %v742, %v740
    %v1179 = vpack.c.b16 %v743, %v741
    %v1180 = vpack.c.b16 %v746, %v744
    %v1181 = vpack.c.b16 %v747, %v745
    %v1182 = vpack.c.b16 %v750, %v748
    %v1183 = vpack.c.b16 %v751, %v749
    %v1184 = vpack.c.b16 %v754, %v752
    %v1185 = vpack.c.b16 %v755, %v753
    %v1186 = vpack.c.b16 %v758, %v756
    %v1187 = vpack.c.b16 %v759, %v757
    %v1188 = vpack.c.b16 %v762, %v760
    %v1189 = vpack.c.b16 %v763, %v761
    %v1190 = vpack.c.b16 %v766, %v764
    %v1191 = vpack.c.b16 %v767, %v765
    %v1192 = vpack.c.b16 %v770, %v768
    %v1193 = vpack.c.b16 %v771, %v769
    %v1194 = vpack.c.b16 %v774, %v772
    %v1195 = vpack.c.b16 %v775, %v773
    %v1196 = vpack.c.b16 %v778, %v776
    %v1197 = vpack.c.b16 %v779, %v777
    %v1198 = vpack.c.b16 %v782, %v780
    %v1199 = vpack.c.b16 %v783, %v781
    %v1200 = vpack.c.b16 %v786, %v784
    %v1201 = vpack.c.b16 %v787, %v785
    %v1202 = vpack.c.b16 %v790, %v788
    %v1203 = vpack.c.b16 %v791, %v789
    %v1204 = vpack.c.b16 %v794, %v792
    %v1205 = vpack.c.b16 %v795, %v793
    %v1206 = vpack.c.b16 %v798, %v796
    %v1207 = vpack.c.b16 %v799, %v797
    %v1208 = vpack.c.b16 %v802, %v800
    %v1209 = vpack.c.b16 %v803, %v801
    %v1210 = vpack.c.b16 %v806, %v804
    %v1211 = vpack.c.b16 %v807, %v805
    %v1212 = vpack.c.b16 %v810, %v808
    %v1213 = vpack.c.b16 %v811, %v809
    %v1214 = vpack.c.b16 %v814, %v812
    %v1215 = vpack.c.b16 %v815, %v813
    %v1216 = vpack.c.b16 %v818, %v816
    %v1217 = vpack.c.b16 %v819, %v817
    %v1218 = vpack.c.b16 %v822, %v820
    %v1219 = vpack.c.b16 %v823, %v821
    %v1220 = vpack.c.b16 %v826, %v824
    %v1221 = vpack.c.b16 %v827, %v825
    %v1222 = vpack.c.b16 %v830, %v828
    %v1223 = vpack.c.b16 %v831, %v829
    %v1224 = vpack.c.b16 %v834, %v832
    %v1225 = vpack.c.b16 %v835, %v833
    %v1226 = vpack.c.b16 %v838, %v836
    %v1227 = vpack.c.b16 %v839, %v837
    %v1228 = vpack.c.b16 %v842, %v840
    %v1229 = vpack.c.b16 %v843, %v841
    %v1230 = vpack.c.b16 %v846, %v844
    %v1231 = vpack.c.b16 %v847, %v845
    %v1232 = vpack.c.b16 %v850, %v848
    %v1233 = vpack.c.b16 %v851, %v849
    %v1234 = vpack.c.b16 %v854, %v852
    %v1235 = vpack.c.b16 %v855, %v853
    %v1236 = vpack.c.b16 %v858, %v856
    %v1237 = vpack.c.b16 %v859, %v857
    %v1238 = vpack.c.b16 %v862, %v860
    %v1239 = vpack.c.b16 %v863, %v861
    %v1240 = vpack.c.b16 %v866, %v864
    %v1241 = vpack.c.b16 %v867, %v865
    %v1242 = vpack.c.b16 %v870, %v868
    %v1243 = vpack.c.b16 %v871, %v869
    %v1244 = vpack.c.b16 %v874, %v872
    %v1245 = vpack.c.b16 %v875, %v873
    %v1246 = vpack.c.b16 %v878, %v876
    %v1247 = vpack.c.b16 %v879, %v877
    %v1248 = vpack.c.b16 %v882, %v880
    %v1249 = vpack.c.b16 %v883, %v881
    %v1250 = vpack.c.b16 %v886, %v884
    %v1251 = vpack.c.b16 %v887, %v885
    %v1252 = vpack.c.b16 %v890, %v888
    %v1253 = vpack.c.b16 %v891, %v889
    %v1254 = vpack.c.b16 %v894, %v892
    %v1255 = vpack.c.b16 %v895, %v893
    %v1256 = vpack.c.b16 %v898, %v896
    %v1257 = vpack.c.b16 %v899, %v897
    %v1258 = vpack.c.b16 %v902, %v900
    %v1259 = vpack.c.b16 %v903, %v901
    %v1260 = vpack.c.b16 %v906, %v904
    %v1261 = vpack.c.b16 %v907, %v905
    %v1262 = vpack.c.b16 %v910, %v908
    %v1263 = vpack.c.b16 %v911, %v909
    %v1264 = vpack.c.b16 %v914, %v912
    %v1265 = vpack.c.b16 %v915, %v913
    %v1266 = vpack.c.b16 %v918, %v916
    %v1267 = vpack.c.b16 %v919, %v917
    %v1268 = vpack.c.b16 %v922, %v920
    %v1269 = vpack.c.b16 %v923, %v921
    %v1270 = vpack.c.b16 %v926, %v924
    %v1271 = vpack.c.b16 %v927, %v925
    %v1272 = vpack.c.b16 %v930, %v928
    %v1273 = vpack.c.b16 %v931, %v929
    %v1274 = vpack.c.b16 %v934, %v932
    %v1275 = vpack.c.b16 %v935, %v933
    %v1276 = vpack.c.b16 %v938, %v936
    %v1277 = vpack.c.b16 %v939, %v937
    %v1278 = vpack.c.b16 %v942, %v940
    %v1279 = vpack.c.b16 %v943, %v941
    %v1280 = vpack.c.b16 %v946, %v944
    %v1281 = vpack.c.b16 %v947, %v945
    %v1282 = vpack.c.b16 %v950, %v948
    %v1283 = vpack.c.b16 %v951, %v949
    %v1284 = vpack.c.b16 %v954, %v952
    %v1285 = vpack.c.b16 %v955, %v953
    %v1286 = vpack.c.b16 %v958, %v956
    %v1287 = vpack.c.b16 %v959, %v957
    %v1288 = vpack.c.b16 %v962, %v960
    %v1289 = vpack.c.b16 %v963, %v961
    %v1290 = vpack.c.b16 %v966, %v964
    %v1291 = vpack.c.b16 %v967, %v965
    %v1292 = vpack.c.b16 %v970, %v968
    %v1293 = vpack.c.b16 %v971, %v969
    %v1294 = vpack.c.b16 %v974, %v972
    %v1295 = vpack.c.b16 %v975, %v973
    %v1296 = vpack.c.b16 %v978, %v976
    %v1297 = vpack.c.b16 %v979, %v977
    %v1298 = vpack.c.b16 %v982, %v980
    %v1299 = vpack.c.b16 %v983, %v981
    %v1300 = vpack.c.b16 %v986, %v984
    %v1301 = vpack.c.b16 %v987, %v985
    %v1302 = vpack.c.b16 %v990, %v988
    %v1303 = vpack.c.b16 %v991, %v989
    %v1304 = vpack.c.b16 %v994, %v992
    %v1305 = vpack.c.b16 %v995, %v993
    %v1306 = vpack.c.b16 %v998, %v996
    %v1307 = vpack.c.b16 %v999, %v997
    %v1308 = vpack.c.b16 %v1002, %v1000
    %v1309 = vpack.c.b16 %v1003, %v1001
    %v1310 = vpack.c.b16 %v1006, %v1004
    %v1311 = vpack.c.b16 %v1007, %v1005
    %v1312 = vpack.c.b16 %v1010, %v1008
    %v1313 = vpack.c.b16 %v1011, %v1009
    %v1314 = vpack.c.b16 %v1014, %v1012
    %v1315 = vpack.c.b16 %v1015, %v1013
    %v1316 = vpack.c.b16 %v1018, %v1016
    %v1317 = vpack.c.b16 %v1019, %v1017
    %v1318 = vpack.c.b16 %v1022, %v1020
    %v1319 = vpack.c.b16 %v1023, %v1021
    %v1320 = vpack.c.b16 %v1026, %v1024
    %v1321 = vpack.c.b16 %v1027, %v1025
    %v1322 = vpack.c.b16 %v1030, %v1028
    %v1323 = vpack.c.b16 %v1031, %v1029
    %v1324 = vpack.c.b16 %v1034, %v1032
    %v1325 = vpack.c.b16 %v1035, %v1033
    %v1326 = vpack.c.b16 %v1038, %v1036
    %v1327 = vpack.c.b16 %v1039, %v1037
    %v1328 = vpack.c.b16 %v1042, %v1040
    %v1329 = vpack.c.b16 %v1043, %v1041
    %v1330 = vpack.c.b16 %v1046, %v1044
    %v1331 = vpack.c.b16 %v1047, %v1045
    %v1332 = vpack.c.b16 %v1050, %v1048
    %v1333 = vpack.c.b16 %v1051, %v1049
    %v1334 = vpack.c.b16 %v1054, %v1052
    %v1335 = vpack.c.b16 %v1055, %v1053
    %v1336 = vpack.c.b16 %v1058, %v1056
    %v1337 = vpack.c.b16 %v1059, %v1057
    %v1338 = vpack.c.b16 %v1062, %v1060
    %v1339 = vpack.c.b16 %v1063, %v1061
    %v1340 = vpack.c.b16 %v1066, %v1064
    %v1341 = vpack.c.b16 %v1067, %v1065
    %v1342 = vpack.c.b16 %v1070, %v1068
    %v1343 = vpack.c.b16 %v1071, %v1069
    %v1344 = vpack.c.b16 %v1074, %v1072
    %v1345 = vpack.c.b16 %v1075, %v1073
    %v1346 = vpack.c.b16 %v1078, %v1076
    %v1347 = vpack.c.b16 %v1079, %v1077
    %v1348 = vpack.c.b16 %v1082, %v1080
    %v1349 = vpack.c.b16 %v1083, %v1081
    %v1350 = vpack.c.b16 %v1086, %v1084
    %v1351 = vpack.c.b16 %v1087, %v1085
    %v1352 = vpack.c.b16 %v1090, %v1088
    %v1353 = vpack.c.b16 %v1091, %v1089
    %v1354 = vpack.c.b16 %v1094, %v1092
    %v1355 = vpack.c.b16 %v1095, %v1093
    %v1356 = vpack.c.b16 %v1098, %v1096
    %v1357 = vpack.c.b16 %v1099, %v1097
    %v1358 = vpack.c.b16 %v1102, %v1100
    %v1359 = vpack.c.b16 %v1103, %v1101
    %1616 = vmatpush.bf16.msra.mxu0 %v1118
    %1617 = vmatpush.bf16.msra.mxu0 %v1116
    %1618 = vmatpush.bf16.msra.mxu0 %v1114
    %1619 = vmatpush.bf16.msra.mxu0 %v1112
    %1620 = vmatpush.bf16.msra.mxu0 %v1110
    %1621 = vmatpush.bf16.msra.mxu0 %v1108
    %1622 = vmatpush.bf16.msra.mxu0 %v1106
    %1623 = vmatpush.bf16.msra.mxu0 %v1104
    %1624 = vmatmul.bf16.gmra.mxu0 %v58
    %v1625 = vpop.f32.mrf.mxu0
    %v1626 = vadd.f32 %v332, %v1625
    %v1627 = vpop.f32.mrf.mxu0
    %1628 = vdwg.mxu0
    %1629 = vmatpush.bf16.msra.mxu0 %v1134
    %1630 = vmatpush.bf16.msra.mxu0 %v1132
    %1631 = vmatpush.bf16.msra.mxu0 %v1130
    %1632 = vmatpush.bf16.msra.mxu0 %v1128
    %1633 = vmatpush.bf16.msra.mxu0 %v1126
    %1634 = vmatpush.bf16.msra.mxu0 %v1124
    %1635 = vmatpush.bf16.msra.mxu0 %v1122
    %1636 = vmatpush.bf16.msra.mxu0 %v1120
    %1637 = vmatmul.bf16.gmra.mxu0 %v59
    %v1638 = vpop.f32.mrf.mxu0
    %v1639 = vadd.f32 %v1626, %v1638
    %v1640 = vpop.f32.mrf.mxu0
    %1641 = vdwg.mxu0
    %1642 = vmatpush.bf16.msra.mxu0 %v1150
    %1643 = vmatpush.bf16.msra.mxu0 %v1148
    %1644 = vmatpush.bf16.msra.mxu0 %v1146
    %1645 = vmatpush.bf16.msra.mxu0 %v1144
    %1646 = vmatpush.bf16.msra.mxu0 %v1142
    %1647 = vmatpush.bf16.msra.mxu0 %v1140
    %1648 = vmatpush.bf16.msra.mxu0 %v1138
    %1649 = vmatpush.bf16.msra.mxu0 %v1136
    %1650 = vmatmul.bf16.gmra.mxu0 %v60
    %v1651 = vpop.f32.mrf.mxu0
    %v1652 = vadd.f32 %v1639, %v1651
    %v1653 = vpop.f32.mrf.mxu0
    %1654 = vdwg.mxu0
    %1655 = vmatpush.bf16.msra.mxu0 %v1166
    %1656 = vmatpush.bf16.msra.mxu0 %v1164
    %1657 = vmatpush.bf16.msra.mxu0 %v1162
    %1658 = vmatpush.bf16.msra.mxu0 %v1160
    %1659 = vmatpush.bf16.msra.mxu0 %v1158
    %1660 = vmatpush.bf16.msra.mxu0 %v1156
    %1661 = vmatpush.bf16.msra.mxu0 %v1154
    %1662 = vmatpush.bf16.msra.mxu0 %v1152
    %1663 = vmatmul.bf16.gmra.mxu0 %v61
    %v1664 = vpop.f32.mrf.mxu0
    %v1665 = vadd.f32 %v1652, %v1664
    %v1666 = vpop.f32.mrf.mxu0
    %1667 = vdwg.mxu0
    %1668 = vmatpush.bf16.msra.mxu0 %v1182
    %1669 = vmatpush.bf16.msra.mxu0 %v1180
    %1670 = vmatpush.bf16.msra.mxu0 %v1178
    %1671 = vmatpush.bf16.msra.mxu0 %v1176
    %1672 = vmatpush.bf16.msra.mxu0 %v1174
    %1673 = vmatpush.bf16.msra.mxu0 %v1172
    %1674 = vmatpush.bf16.msra.mxu0 %v1170
    %1675 = vmatpush.bf16.msra.mxu0 %v1168
    %1676 = vmatmul.bf16.gmra.mxu0 %v62
    %v1677 = vpop.f32.mrf.mxu0
    %v1678 = vadd.f32 %v1665, %v1677
    %v1679 = vpop.f32.mrf.mxu0
    %1680 = vdwg.mxu0
    %1681 = vmatpush.bf16.msra.mxu0 %v1198
    %1682 = vmatpush.bf16.msra.mxu0 %v1196
    %1683 = vmatpush.bf16.msra.mxu0 %v1194
    %1684 = vmatpush.bf16.msra.mxu0 %v1192
    %1685 = vmatpush.bf16.msra.mxu0 %v1190
    %1686 = vmatpush.bf16.msra.mxu0 %v1188
    %1687 = vmatpush.bf16.msra.mxu0 %v1186
    %1688 = vmatpush.bf16.msra.mxu0 %v1184
    %1689 = vmatmul.bf16.gmra.mxu0 %v63
    %v1690 = vpop.f32.mrf.mxu0
    %v1691 = vadd.f32 %v1678, %v1690
    %v1692 = vpop.f32.mrf.mxu0
    %1693 = vdwg.mxu0
    %1694 = vmatpush.bf16.msra.mxu0 %v1214
    %1695 = vmatpush.bf16.msra.mxu0 %v1212
    %1696 = vmatpush.bf16.msra.mxu0 %v1210
    %1697 = vmatpush.bf16.msra.mxu0 %v1208
    %1698 = vmatpush.bf16.msra.mxu0 %v1206
    %1699 = vmatpush.bf16.msra.mxu0 %v1204
    %1700 = vmatpush.bf16.msra.mxu0 %v1202
    %1701 = vmatpush.bf16.msra.mxu0 %v1200
    %1702 = vmatmul.bf16.gmra.mxu0 %v64
    %v1703 = vpop.f32.mrf.mxu0
    %v1704 = vadd.f32 %v1691, %v1703
    %v1705 = vpop.f32.mrf.mxu0
    %1706 = vdwg.mxu0
    %1707 = vmatpush.bf16.msra.mxu0 %v1230
    %1708 = vmatpush.bf16.msra.mxu0 %v1228
    %1709 = vmatpush.bf16.msra.mxu0 %v1226
    %1710 = vmatpush.bf16.msra.mxu0 %v1224
    %1711 = vmatpush.bf16.msra.mxu0 %v1222
    %1712 = vmatpush.bf16.msra.mxu0 %v1220
    %1713 = vmatpush.bf16.msra.mxu0 %v1218
    %1714 = vmatpush.bf16.msra.mxu0 %v1216
    %1715 = vmatmul.bf16.gmra.mxu0 %v65
    %v1716 = vpop.f32.mrf.mxu0
    %v1717 = vadd.f32 %v1704, %v1716
    %v1718 = vpop.f32.mrf.mxu0
    %1719 = vdwg.mxu0
    %1720 = vmatpush.bf16.msra.mxu0 %v1246
    %1721 = vmatpush.bf16.msra.mxu0 %v1244
    %1722 = vmatpush.bf16.msra.mxu0 %v1242
    %1723 = vmatpush.bf16.msra.mxu0 %v1240
    %1724 = vmatpush.bf16.msra.mxu0 %v1238
    %1725 = vmatpush.bf16.msra.mxu0 %v1236
    %1726 = vmatpush.bf16.msra.mxu0 %v1234
    %1727 = vmatpush.bf16.msra.mxu0 %v1232
    %1728 = vmatmul.bf16.gmra.mxu0 %v66
    %v1729 = vpop.f32.mrf.mxu0
    %v1730 = vadd.f32 %v1717, %v1729
    %v1731 = vpop.f32.mrf.mxu0
    %1732 = vdwg.mxu0
    %1733 = vmatpush.bf16.msra.mxu0 %v1262
    %1734 = vmatpush.bf16.msra.mxu0 %v1260
    %1735 = vmatpush.bf16.msra.mxu0 %v1258
    %1736 = vmatpush.bf16.msra.mxu0 %v1256
    %1737 = vmatpush.bf16.msra.mxu0 %v1254
    %1738 = vmatpush.bf16.msra.mxu0 %v1252
    %1739 = vmatpush.bf16.msra.mxu0 %v1250
    %1740 = vmatpush.bf16.msra.mxu0 %v1248
    %1741 = vmatmul.bf16.gmra.mxu0 %v67
    %v1742 = vpop.f32.mrf.mxu0
    %v1743 = vadd.f32 %v1730, %v1742
    %v1744 = vpop.f32.mrf.mxu0
    %1745 = vdwg.mxu0
    %1746 = vmatpush.bf16.msra.mxu0 %v1278
    %1747 = vmatpush.bf16.msra.mxu0 %v1276
    %1748 = vmatpush.bf16.msra.mxu0 %v1274
    %1749 = vmatpush.bf16.msra.mxu0 %v1272
    %1750 = vmatpush.bf16.msra.mxu0 %v1270
    %1751 = vmatpush.bf16.msra.mxu0 %v1268
    %1752 = vmatpush.bf16.msra.mxu0 %v1266
    %1753 = vmatpush.bf16.msra.mxu0 %v1264
    %1754 = vmatmul.bf16.gmra.mxu0 %v68
    %v1755 = vpop.f32.mrf.mxu0
    %v1756 = vadd.f32 %v1743, %v1755
    %v1757 = vpop.f32.mrf.mxu0
    %1758 = vdwg.mxu0
    %1759 = vmatpush.bf16.msra.mxu0 %v1294
    %1760 = vmatpush.bf16.msra.mxu0 %v1292
    %1761 = vmatpush.bf16.msra.mxu0 %v1290
    %1762 = vmatpush.bf16.msra.mxu0 %v1288
    %1763 = vmatpush.bf16.msra.mxu0 %v1286
    %1764 = vmatpush.bf16.msra.mxu0 %v1284
    %1765 = vmatpush.bf16.msra.mxu0 %v1282
    %1766 = vmatpush.bf16.msra.mxu0 %v1280
    %1767 = vmatmul.bf16.gmra.mxu0 %v69
    %v1768 = vpop.f32.mrf.mxu0
    %v1769 = vadd.f32 %v1756, %v1768
    %v1770 = vpop.f32.mrf.mxu0
    %1771 = vdwg.mxu0
    %1772 = vmatpush.bf16.msra.mxu0 %v1310
    %1773 = vmatpush.bf16.msra.mxu0 %v1308
    %1774 = vmatpush.bf16.msra.mxu0 %v1306
    %1775 = vmatpush.bf16.msra.mxu0 %v1304
    %1776 = vmatpush.bf16.msra.mxu0 %v1302
    %1777 = vmatpush.bf16.msra.mxu0 %v1300
    %1778 = vmatpush.bf16.msra.mxu0 %v1298
    %1779 = vmatpush.bf16.msra.mxu0 %v1296
    %1780 = vmatmul.bf16.gmra.mxu0 %v70
    %v1781 = vpop.f32.mrf.mxu0
    %v1782 = vadd.f32 %v1769, %v1781
    %v1783 = vpop.f32.mrf.mxu0
    %1784 = vdwg.mxu0
    %1785 = vmatpush.bf16.msra.mxu0 %v1326
    %1786 = vmatpush.bf16.msra.mxu0 %v1324
    %1787 = vmatpush.bf16.msra.mxu0 %v1322
    %1788 = vmatpush.bf16.msra.mxu0 %v1320
    %1789 = vmatpush.bf16.msra.mxu0 %v1318
    %1790 = vmatpush.bf16.msra.mxu0 %v1316
    %1791 = vmatpush.bf16.msra.mxu0 %v1314
    %1792 = vmatpush.bf16.msra.mxu0 %v1312
    %1793 = vmatmul.bf16.gmra.mxu0 %v71
    %v1794 = vpop.f32.mrf.mxu0
    %v1795 = vadd.f32 %v1782, %v1794
    %v1796 = vpop.f32.mrf.mxu0
    %1797 = vdwg.mxu0
    %1798 = vmatpush.bf16.msra.mxu0 %v1342
    %1799 = vmatpush.bf16.msra.mxu0 %v1340
    %1800 = vmatpush.bf16.msra.mxu0 %v1338
    %1801 = vmatpush.bf16.msra.mxu0 %v1336
    %1802 = vmatpush.bf16.msra.mxu0 %v1334
    %1803 = vmatpush.bf16.msra.mxu0 %v1332
    %1804 = vmatpush.bf16.msra.mxu0 %v1330
    %1805 = vmatpush.bf16.msra.mxu0 %v1328
    %1806 = vmatmul.bf16.gmra.mxu0 %v72
    %v1807 = vpop.f32.mrf.mxu0
    %v1808 = vadd.f32 %v1795, %v1807
    %v1809 = vpop.f32.mrf.mxu0
    %1810 = vdwg.mxu0
    %1811 = vmatpush.bf16.msra.mxu0 %v1358
    %1812 = vmatpush.bf16.msra.mxu0 %v1356
    %1813 = vmatpush.bf16.msra.mxu0 %v1354
    %1814 = vmatpush.bf16.msra.mxu0 %v1352
    %1815 = vmatpush.bf16.msra.mxu0 %v1350
    %1816 = vmatpush.bf16.msra.mxu0 %v1348
    %1817 = vmatpush.bf16.msra.mxu0 %v1346
    %1818 = vmatpush.bf16.msra.mxu0 %v1344
    %1819 = vmatmul.bf16.gmra.mxu0 %v73
    %v1820 = vpop.f32.mrf.mxu0
    %v1821 = vadd.f32 %v1808, %v1820
    %v1822 = vpop.f32.mrf.mxu0
    %1823 = vdwg.mxu0
    %1824 = vmatpush.bf16.msra.mxu0 %v1119
    %1825 = vmatpush.bf16.msra.mxu0 %v1117
    %1826 = vmatpush.bf16.msra.mxu0 %v1115
    %1827 = vmatpush.bf16.msra.mxu0 %v1113
    %1828 = vmatpush.bf16.msra.mxu0 %v1111
    %1829 = vmatpush.bf16.msra.mxu0 %v1109
    %1830 = vmatpush.bf16.msra.mxu0 %v1107
    %1831 = vmatpush.bf16.msra.mxu0 %v1105
    %1832 = vmatmul.bf16.gmra.mxu0 %v58
    %v1833 = vpop.f32.mrf.mxu0
    %v1834 = vadd.f32 %v333, %v1833
    %v1835 = vpop.f32.mrf.mxu0
    %1836 = vdwg.mxu0
    %1837 = vmatpush.bf16.msra.mxu0 %v1135
    %1838 = vmatpush.bf16.msra.mxu0 %v1133
    %1839 = vmatpush.bf16.msra.mxu0 %v1131
    %1840 = vmatpush.bf16.msra.mxu0 %v1129
    %1841 = vmatpush.bf16.msra.mxu0 %v1127
    %1842 = vmatpush.bf16.msra.mxu0 %v1125
    %1843 = vmatpush.bf16.msra.mxu0 %v1123
    %1844 = vmatpush.bf16.msra.mxu0 %v1121
    %1845 = vmatmul.bf16.gmra.mxu0 %v59
    %v1846 = vpop.f32.mrf.mxu0
    %v1847 = vadd.f32 %v1834, %v1846
    %v1848 = vpop.f32.mrf.mxu0
    %1849 = vdwg.mxu0
    %1850 = vmatpush.bf16.msra.mxu0 %v1151
    %1851 = vmatpush.bf16.msra.mxu0 %v1149
    %1852 = vmatpush.bf16.msra.mxu0 %v1147
    %1853 = vmatpush.bf16.msra.mxu0 %v1145
    %1854 = vmatpush.bf16.msra.mxu0 %v1143
    %1855 = vmatpush.bf16.msra.mxu0 %v1141
    %1856 = vmatpush.bf16.msra.mxu0 %v1139
    %1857 = vmatpush.bf16.msra.mxu0 %v1137
    %1858 = vmatmul.bf16.gmra.mxu0 %v60
    %v1859 = vpop.f32.mrf.mxu0
    %v1860 = vadd.f32 %v1847, %v1859
    %v1861 = vpop.f32.mrf.mxu0
    %1862 = vdwg.mxu0
    %1863 = vmatpush.bf16.msra.mxu0 %v1167
    %1864 = vmatpush.bf16.msra.mxu0 %v1165
    %1865 = vmatpush.bf16.msra.mxu0 %v1163
    %1866 = vmatpush.bf16.msra.mxu0 %v1161
    %1867 = vmatpush.bf16.msra.mxu0 %v1159
    %1868 = vmatpush.bf16.msra.mxu0 %v1157
    %1869 = vmatpush.bf16.msra.mxu0 %v1155
    %1870 = vmatpush.bf16.msra.mxu0 %v1153
    %1871 = vmatmul.bf16.gmra.mxu0 %v61
    %v1872 = vpop.f32.mrf.mxu0
    %v1873 = vadd.f32 %v1860, %v1872
    %v1874 = vpop.f32.mrf.mxu0
    %1875 = vdwg.mxu0
    %1876 = vmatpush.bf16.msra.mxu0 %v1183
    %1877 = vmatpush.bf16.msra.mxu0 %v1181
    %1878 = vmatpush.bf16.msra.mxu0 %v1179
    %1879 = vmatpush.bf16.msra.mxu0 %v1177
    %1880 = vmatpush.bf16.msra.mxu0 %v1175
    %1881 = vmatpush.bf16.msra.mxu0 %v1173
    %1882 = vmatpush.bf16.msra.mxu0 %v1171
    %1883 = vmatpush.bf16.msra.mxu0 %v1169
    %1884 = vmatmul.bf16.gmra.mxu0 %v62
    %v1885 = vpop.f32.mrf.mxu0
    %v1886 = vadd.f32 %v1873, %v1885
    %v1887 = vpop.f32.mrf.mxu0
    %1888 = vdwg.mxu0
    %1889 = vmatpush.bf16.msra.mxu0 %v1199
    %1890 = vmatpush.bf16.msra.mxu0 %v1197
    %1891 = vmatpush.bf16.msra.mxu0 %v1195
    %1892 = vmatpush.bf16.msra.mxu0 %v1193
    %1893 = vmatpush.bf16.msra.mxu0 %v1191
    %1894 = vmatpush.bf16.msra.mxu0 %v1189
    %1895 = vmatpush.bf16.msra.mxu0 %v1187
    %1896 = vmatpush.bf16.msra.mxu0 %v1185
    %1897 = vmatmul.bf16.gmra.mxu0 %v63
    %v1898 = vpop.f32.mrf.mxu0
    %v1899 = vadd.f32 %v1886, %v1898
    %v1900 = vpop.f32.mrf.mxu0
    %1901 = vdwg.mxu0
    %1902 = vmatpush.bf16.msra.mxu0 %v1215
    %1903 = vmatpush.bf16.msra.mxu0 %v1213
    %1904 = vmatpush.bf16.msra.mxu0 %v1211
    %1905 = vmatpush.bf16.msra.mxu0 %v1209
    %1906 = vmatpush.bf16.msra.mxu0 %v1207
    %1907 = vmatpush.bf16.msra.mxu0 %v1205
    %1908 = vmatpush.bf16.msra.mxu0 %v1203
    %1909 = vmatpush.bf16.msra.mxu0 %v1201
    %1910 = vmatmul.bf16.gmra.mxu0 %v64
    %v1911 = vpop.f32.mrf.mxu0
    %v1912 = vadd.f32 %v1899, %v1911
    %v1913 = vpop.f32.mrf.mxu0
    %1914 = vdwg.mxu0
    %1915 = vmatpush.bf16.msra.mxu0 %v1231
    %1916 = vmatpush.bf16.msra.mxu0 %v1229
    %1917 = vmatpush.bf16.msra.mxu0 %v1227
    %1918 = vmatpush.bf16.msra.mxu0 %v1225
    %1919 = vmatpush.bf16.msra.mxu0 %v1223
    %1920 = vmatpush.bf16.msra.mxu0 %v1221
    %1921 = vmatpush.bf16.msra.mxu0 %v1219
    %1922 = vmatpush.bf16.msra.mxu0 %v1217
    %1923 = vmatmul.bf16.gmra.mxu0 %v65
    %v1924 = vpop.f32.mrf.mxu0
    %v1925 = vadd.f32 %v1912, %v1924
    %v1926 = vpop.f32.mrf.mxu0
    %1927 = vdwg.mxu0
    %1928 = vmatpush.bf16.msra.mxu0 %v1247
    %1929 = vmatpush.bf16.msra.mxu0 %v1245
    %1930 = vmatpush.bf16.msra.mxu0 %v1243
    %1931 = vmatpush.bf16.msra.mxu0 %v1241
    %1932 = vmatpush.bf16.msra.mxu0 %v1239
    %1933 = vmatpush.bf16.msra.mxu0 %v1237
    %1934 = vmatpush.bf16.msra.mxu0 %v1235
    %1935 = vmatpush.bf16.msra.mxu0 %v1233
    %1936 = vmatmul.bf16.gmra.mxu0 %v66
    %v1937 = vpop.f32.mrf.mxu0
    %v1938 = vadd.f32 %v1925, %v1937
    %v1939 = vpop.f32.mrf.mxu0
    %1940 = vdwg.mxu0
    %1941 = vmatpush.bf16.msra.mxu0 %v1263
    %1942 = vmatpush.bf16.msra.mxu0 %v1261
    %1943 = vmatpush.bf16.msra.mxu0 %v1259
    %1944 = vmatpush.bf16.msra.mxu0 %v1257
    %1945 = vmatpush.bf16.msra.mxu0 %v1255
    %1946 = vmatpush.bf16.msra.mxu0 %v1253
    %1947 = vmatpush.bf16.msra.mxu0 %v1251
    %1948 = vmatpush.bf16.msra.mxu0 %v1249
    %1949 = vmatmul.bf16.gmra.mxu0 %v67
    %v1950 = vpop.f32.mrf.mxu0
    %v1951 = vadd.f32 %v1938, %v1950
    %v1952 = vpop.f32.mrf.mxu0
    %1953 = vdwg.mxu0
    %1954 = vmatpush.bf16.msra.mxu0 %v1279
    %1955 = vmatpush.bf16.msra.mxu0 %v1277
    %1956 = vmatpush.bf16.msra.mxu0 %v1275
    %1957 = vmatpush.bf16.msra.mxu0 %v1273
    %1958 = vmatpush.bf16.msra.mxu0 %v1271
    %1959 = vmatpush.bf16.msra.mxu0 %v1269
    %1960 = vmatpush.bf16.msra.mxu0 %v1267
    %1961 = vmatpush.bf16.msra.mxu0 %v1265
    %1962 = vmatmul.bf16.gmra.mxu0 %v68
    %v1963 = vpop.f32.mrf.mxu0
    %v1964 = vadd.f32 %v1951, %v1963
    %v1965 = vpop.f32.mrf.mxu0
    %1966 = vdwg.mxu0
    %1967 = vmatpush.bf16.msra.mxu0 %v1295
    %1968 = vmatpush.bf16.msra.mxu0 %v1293
    %1969 = vmatpush.bf16.msra.mxu0 %v1291
    %1970 = vmatpush.bf16.msra.mxu0 %v1289
    %1971 = vmatpush.bf16.msra.mxu0 %v1287
    %1972 = vmatpush.bf16.msra.mxu0 %v1285
    %1973 = vmatpush.bf16.msra.mxu0 %v1283
    %1974 = vmatpush.bf16.msra.mxu0 %v1281
    %1975 = vmatmul.bf16.gmra.mxu0 %v69
    %v1976 = vpop.f32.mrf.mxu0
    %v1977 = vadd.f32 %v1964, %v1976
    %v1978 = vpop.f32.mrf.mxu0
    %1979 = vdwg.mxu0
    %1980 = vmatpush.bf16.msra.mxu0 %v1311
    %1981 = vmatpush.bf16.msra.mxu0 %v1309
    %1982 = vmatpush.bf16.msra.mxu0 %v1307
    %1983 = vmatpush.bf16.msra.mxu0 %v1305
    %1984 = vmatpush.bf16.msra.mxu0 %v1303
    %1985 = vmatpush.bf16.msra.mxu0 %v1301
    %1986 = vmatpush.bf16.msra.mxu0 %v1299
    %1987 = vmatpush.bf16.msra.mxu0 %v1297
    %1988 = vmatmul.bf16.gmra.mxu0 %v70
    %v1989 = vpop.f32.mrf.mxu0
    %v1990 = vadd.f32 %v1977, %v1989
    %v1991 = vpop.f32.mrf.mxu0
    %1992 = vdwg.mxu0
    %1993 = vmatpush.bf16.msra.mxu0 %v1327
    %1994 = vmatpush.bf16.msra.mxu0 %v1325
    %1995 = vmatpush.bf16.msra.mxu0 %v1323
    %1996 = vmatpush.bf16.msra.mxu0 %v1321
    %1997 = vmatpush.bf16.msra.mxu0 %v1319
    %1998 = vmatpush.bf16.msra.mxu0 %v1317
    %1999 = vmatpush.bf16.msra.mxu0 %v1315
    %2000 = vmatpush.bf16.msra.mxu0 %v1313
    %2001 = vmatmul.bf16.gmra.mxu0 %v71
    %v2002 = vpop.f32.mrf.mxu0
    %v2003 = vadd.f32 %v1990, %v2002
    %v2004 = vpop.f32.mrf.mxu0
    %2005 = vdwg.mxu0
    %2006 = vmatpush.bf16.msra.mxu0 %v1343
    %2007 = vmatpush.bf16.msra.mxu0 %v1341
    %2008 = vmatpush.bf16.msra.mxu0 %v1339
    %2009 = vmatpush.bf16.msra.mxu0 %v1337
    %2010 = vmatpush.bf16.msra.mxu0 %v1335
    %2011 = vmatpush.bf16.msra.mxu0 %v1333
    %2012 = vmatpush.bf16.msra.mxu0 %v1331
    %2013 = vmatpush.bf16.msra.mxu0 %v1329
    %2014 = vmatmul.bf16.gmra.mxu0 %v72
    %v2015 = vpop.f32.mrf.mxu0
    %v2016 = vadd.f32 %v2003, %v2015
    %v2017 = vpop.f32.mrf.mxu0
    %2018 = vdwg.mxu0
    %2019 = vmatpush.bf16.msra.mxu0 %v1359
    %2020 = vmatpush.bf16.msra.mxu0 %v1357
    %2021 = vmatpush.bf16.msra.mxu0 %v1355
    %2022 = vmatpush.bf16.msra.mxu0 %v1353
    %2023 = vmatpush.bf16.msra.mxu0 %v1351
    %2024 = vmatpush.bf16.msra.mxu0 %v1349
    %2025 = vmatpush.bf16.msra.mxu0 %v1347
    %2026 = vmatpush.bf16.msra.mxu0 %v1345
    %2027 = vmatmul.bf16.gmra.mxu0 %v73
    %v2028 = vpop.f32.mrf.mxu0
    %v2029 = vadd.f32 %v2016, %v2028
    %v2030 = vpop.f32.mrf.mxu0
    %2031 = vdwg.mxu0
    %v2032 = vmax.f32 %v1821, 0.0
    %v2033 = vmax.f32 %v2029, 0.0
    %v2034 = vpack.c.bf16 %v2032, %v2032
    %v2035 = vpack.c.bf16 %v2033, %v2033
    %v2036 = vld [vmem:[%s3] sm:$0xf]
    %v2037 = vld [vmem:[%s3 + $0x4] sm:$0xf]
    %v2038 = vld [vmem:[%s3 + $0x8] sm:$0xf]
    %v2039 = vld [vmem:[%s3 + $0xc] sm:$0xf]
    %v2040 = vld [vmem:[%s3 + $0x10] sm:$0xf]
    %v2041 = vld [vmem:[%s3 + $0x14] sm:$0xf]
    %v2042 = vld [vmem:[%s3 + $0x18] sm:$0xf]
    %v2043 = vld [vmem:[%s3 + $0x1c] sm:$0xf]
    %v2044 = vld [vmem:[%s3 + $0x20] sm:$0xf]
    %v2045 = vld [vmem:[%s3 + $0x24] sm:$0xf]
    %v2046 = vld [vmem:[%s3 + $0x28] sm:$0xf]
    %v2047 = vld [vmem:[%s3 + $0x2c] sm:$0xf]
    %v2048 = vld [vmem:[%s3 + $0x30] sm:$0xf]
    %v2049 = vld [vmem:[%s3 + $0x34] sm:$0xf]
    %v2050 = vld [vmem:[%s3 + $0x38] sm:$0xf]
    %v2051 = vld [vmem:[%s3 + $0x3c] sm:$0xf]
    %v2052 = vld [vmem:[%s3 + $0x40] sm:$0xf]
    %v2053 = vld [vmem:[%s3 + $0x44] sm:$0xf]
    %v2054 = vld [vmem:[%s3 + $0x48] sm:$0xf]
    %v2055 = vld [vmem:[%s3 + $0x4c] sm:$0xf]
    %v2056 = vld [vmem:[%s3 + $0x50] sm:$0xf]
    %v2057 = vld [vmem:[%s3 + $0x54] sm:$0xf]
    %v2058 = vld [vmem:[%s3 + $0x58] sm:$0xf]
    %v2059 = vld [vmem:[%s3 + $0x5c] sm:$0xf]
    %v2060 = vld [vmem:[%s3 + $0x60] sm:$0xf]
    %v2061 = vld [vmem:[%s3 + $0x64] sm:$0xf]
    %v2062 = vld [vmem:[%s3 + $0x68] sm:$0xf]
    %v2063 = vld [vmem:[%s3 + $0x6c] sm:$0xf]
    %v2064 = vld [vmem:[%s3 + $0x70] sm:$0xf]
    %v2065 = vld [vmem:[%s3 + $0x74] sm:$0xf]
    %v2066 = vld [vmem:[%s3 + $0x78] sm:$0xf]
    %v2067 = vld [vmem:[%s3 + $0x7c] sm:$0xf]
    %v2068 = vld [vmem:[%s4] sm:$0x1]
    %v2070 = vperm.slane %v2068, 0
    %v2104 = vunpack.c.l.b16 %v2036
    %v2105 = vunpack.c.l.b16 %v2037
    %v2106 = vunpack.c.l.b16 %v2038
    %v2107 = vunpack.c.l.b16 %v2039
    %v2108 = vunpack.c.l.b16 %v2040
    %v2109 = vunpack.c.l.b16 %v2041
    %v2110 = vunpack.c.l.b16 %v2042
    %v2111 = vunpack.c.l.b16 %v2043
    %v2112 = vunpack.c.l.b16 %v2044
    %v2113 = vunpack.c.l.b16 %v2045
    %v2114 = vunpack.c.l.b16 %v2046
    %v2115 = vunpack.c.l.b16 %v2047
    %v2116 = vunpack.c.l.b16 %v2048
    %v2117 = vunpack.c.l.b16 %v2049
    %v2118 = vunpack.c.l.b16 %v2050
    %v2119 = vunpack.c.l.b16 %v2051
    %v2120 = vunpack.c.l.b16 %v2052
    %v2121 = vunpack.c.l.b16 %v2053
    %v2122 = vunpack.c.l.b16 %v2054
    %v2123 = vunpack.c.l.b16 %v2055
    %v2124 = vunpack.c.l.b16 %v2056
    %v2125 = vunpack.c.l.b16 %v2057
    %v2126 = vunpack.c.l.b16 %v2058
    %v2127 = vunpack.c.l.b16 %v2059
    %v2128 = vunpack.c.l.b16 %v2060
    %v2129 = vunpack.c.l.b16 %v2061
    %v2130 = vunpack.c.l.b16 %v2062
    %v2131 = vunpack.c.l.b16 %v2063
    %v2132 = vunpack.c.l.b16 %v2064
    %v2133 = vunpack.c.l.b16 %v2065
    %v2134 = vunpack.c.l.b16 %v2066
    %v2135 = vunpack.c.l.b16 %v2067
    %v2136 = vpack.c.b16 %v2105, %v2104
    %v2137 = vpack.c.b16 %v2107, %v2106
    %v2138 = vpack.c.b16 %v2109, %v2108
    %v2139 = vpack.c.b16 %v2111, %v2110
    %v2140 = vpack.c.b16 %v2113, %v2112
    %v2141 = vpack.c.b16 %v2115, %v2114
    %v2142 = vpack.c.b16 %v2117, %v2116
    %v2143 = vpack.c.b16 %v2119, %v2118
    %v2144 = vpack.c.b16 %v2121, %v2120
    %v2145 = vpack.c.b16 %v2123, %v2122
    %v2146 = vpack.c.b16 %v2125, %v2124
    %v2147 = vpack.c.b16 %v2127, %v2126
    %v2148 = vpack.c.b16 %v2129, %v2128
    %v2149 = vpack.c.b16 %v2131, %v2130
    %v2150 = vpack.c.b16 %v2133, %v2132
    %v2151 = vpack.c.b16 %v2135, %v2134
    %2168 = vmatpush.bf16.msra.mxu0 %v2143
    %2169 = vmatpush.bf16.msra.mxu0 %v2142
    %2170 = vmatpush.bf16.msra.mxu0 %v2141
    %2171 = vmatpush.bf16.msra.mxu0 %v2140
    %2172 = vmatpush.bf16.msra.mxu0 %v2139
    %2173 = vmatpush.bf16.msra.mxu0 %v2138
    %2174 = vmatpush.bf16.msra.mxu0 %v2137
    %2175 = vmatpush.bf16.msra.mxu0 %v2136
    %2176 = vmatmul.bf16.gmra.mxu0 %v2034
    %v2177 = vpop.f32.mrf.mxu0
    %v2178 = vadd.f32 %v2070, %v2177
    %v2179 = vpop.f32.mrf.mxu0
    %2180 = vdwg.mxu0
    %2181 = vmatpush.bf16.msra.mxu0 %v2151
    %2182 = vmatpush.bf16.msra.mxu0 %v2150
    %2183 = vmatpush.bf16.msra.mxu0 %v2149
    %2184 = vmatpush.bf16.msra.mxu0 %v2148
    %2185 = vmatpush.bf16.msra.mxu0 %v2147
    %2186 = vmatpush.bf16.msra.mxu0 %v2146
    %2187 = vmatpush.bf16.msra.mxu0 %v2145
    %2188 = vmatpush.bf16.msra.mxu0 %v2144
    %2189 = vmatmul.bf16.gmra.mxu0 %v2035
    %v2190 = vpop.f32.mrf.mxu0
    %v2191 = vadd.f32 %v2178, %v2190
    %v2192 = vpop.f32.mrf.mxu0
    %2193 = vdwg.mxu0
    %v2194 = vmax.f32 %v2191, 0.0
    %v2195 = vpack.c.bf16 %v2194, %v2194
    %v2196 = vld [vmem:[%s5] sm:$0xf]
    %v2197 = vld [vmem:[%s5 + $0x4] sm:$0xf]
    %v2198 = vld [vmem:[%s5 + $0x8] sm:$0xf]
    %v2199 = vld [vmem:[%s5 + $0xc] sm:$0xf]
    %v2200 = vld [vmem:[%s5 + $0x10] sm:$0xf]
    %v2201 = vld [vmem:[%s5 + $0x14] sm:$0xf]
    %v2202 = vld [vmem:[%s5 + $0x18] sm:$0xf]
    %v2203 = vld [vmem:[%s5 + $0x1c] sm:$0xf]
    %v2204 = vld [vmem:[%s5 + $0x20] sm:$0xf]
    %v2205 = vld [vmem:[%s5 + $0x24] sm:$0xf]
    %v2206 = vld [vmem:[%s5 + $0x28] sm:$0xf]
    %v2207 = vld [vmem:[%s5 + $0x2c] sm:$0xf]
    %v2208 = vld [vmem:[%s5 + $0x30] sm:$0xf]
    %v2209 = vld [vmem:[%s5 + $0x34] sm:$0xf]
    %v2210 = vld [vmem:[%s5 + $0x38] sm:$0xf]
    %v2211 = vld [vmem:[%s5 + $0x3c] sm:$0xf]
    %v2212 = vld [vmem:[%s6] sm:$0x1]
    %v2214 = vperm.slane %v2212, 0
    %v2232 = vunpack.c.l.b16 %v2196
    %v2233 = vunpack.c.l.b16 %v2197
    %v2234 = vunpack.c.l.b16 %v2198
    %v2235 = vunpack.c.l.b16 %v2199
    %v2236 = vunpack.c.l.b16 %v2200
    %v2237 = vunpack.c.l.b16 %v2201
    %v2238 = vunpack.c.l.b16 %v2202
    %v2239 = vunpack.c.l.b16 %v2203
    %v2240 = vunpack.c.l.b16 %v2204
    %v2241 = vunpack.c.l.b16 %v2205
    %v2242 = vunpack.c.l.b16 %v2206
    %v2243 = vunpack.c.l.b16 %v2207
    %v2244 = vunpack.c.l.b16 %v2208
    %v2245 = vunpack.c.l.b16 %v2209
    %v2246 = vunpack.c.l.b16 %v2210
    %v2247 = vunpack.c.l.b16 %v2211
    %v2248 = vpack.c.b16 %v2233, %v2232
    %v2249 = vpack.c.b16 %v2235, %v2234
    %v2250 = vpack.c.b16 %v2237, %v2236
    %v2251 = vpack.c.b16 %v2239, %v2238
    %v2252 = vpack.c.b16 %v2241, %v2240
    %v2253 = vpack.c.b16 %v2243, %v2242
    %v2254 = vpack.c.b16 %v2245, %v2244
    %v2255 = vpack.c.b16 %v2247, %v2246
    %2264 = vmatpush.bf16.msra.mxu0 %v2255
    %2265 = vmatpush.bf16.msra.mxu0 %v2254
    %2266 = vmatpush.bf16.msra.mxu0 %v2253
    %2267 = vmatpush.bf16.msra.mxu0 %v2252
    %2268 = vmatpush.bf16.msra.mxu0 %v2251
    %2269 = vmatpush.bf16.msra.mxu0 %v2250
    %2270 = vmatpush.bf16.msra.mxu0 %v2249
    %2271 = vmatpush.bf16.msra.mxu0 %v2248
    %2272 = vmatmul.bf16.gmra.mxu0 %v2195
    %v2273 = vpop.f32.mrf.mxu0
    %v2274 = vadd.f32 %v2214, %v2273
    %v2275 = vpop.f32.mrf.mxu0
    %2276 = vdwg.mxu0
    %v2277 = vlaneseq
    %v2278 = vand.u32 %v2277, 127
    %vm2279 = vcmp.lt.s32.totalorder %v2278, 2
    %v2280 = vsel %vm2279, %v2274, -inf
    %2281 = vmax.xlane.f32.xlu0 %v2280
    %v2282 = vpop.xlane.xlu0 %2281
    %v2283 = vsub.f32 %v2280, %v2282
    %v2284 = vmul.f32 %v2283, 1.442695
    %v2285 = vpow.pop %v2284
    %2286 = vadd.xlane.f32.xlu0 %v2285
    %v2287 = vpop.xlane.xlu0 %2286
    %v2288 = vrcp.pop %v2287
    %v2289 = vmul.f32 %v2285, %v2288
    %v2290 = vpack.c.bf16 %v2289, %v2289
    %2291 = vst [vmem:[%s7] sm:$0xf] %v2290
    // Predicated region
    $region34: #{simplenet_forward.1} parent=1 // pred_check
      _
    $region35: #{simplenet_forward.1} parent=1 // pred_check_branch
      %2293 = sbr.rel (0) target = $region37
    $region36: #{simplenet_forward.1} parent=1 // pred_region
      _
    $region37: #{simplenet_forward.1} parent=1 // pred_fallthru
      _
    // Predicated region
    $region38: #{simplenet_forward.1} parent=1 // pred_check
      _
    $region39: #{simplenet_forward.1} parent=1 // pred_check_branch
      %2295 = sbr.rel (0) target = $region41
    $region40: #{simplenet_forward.1} parent=1 // pred_region
      _
    $region41: #{simplenet_forward.1} parent=1 // pred_fallthru
      _
    %2296 = vsyncpa [#allocation3], 1

</llo_original>
